<compile_context>
chip_gen: v7x
topology: tpu7x:2x2x1
jax: 0.10.0
libtpu: 0.0.40
codegen_flags: <defaults>
</compile_context>

<pallas_src>
import functools

import jax
import jax.numpy as jnp
from jax.experimental import pallas as pl
from jax.experimental.pallas import tpu as pltpu

LN_EPS = 1e-5          # PyTorch nn.LayerNorm default
LANE = 128             # TPU lane width; gates / outputs padded to this

# Flipped to False if a real kernel ever fails to lower with Buffered(1).
_BUFFERED_RESIDENTS_OK = True


def _round_up(n, m):
    return ((n + m - 1) // m) * m


def _round_down(n, m):
    return (n // m) * m


@functools.lru_cache(maxsize=None)
def _vmem_budget_bytes():
    """Chip VMEM capacity minus headroom for compiler scratch."""
    cap = 64 * 1024 * 1024  # conservative fallback: v7x per-core VMEM
    try:
        cap = int(getattr(pltpu.get_tpu_info(), "vmem_capacity_bytes", cap))
    except Exception:
        pass
    return max(32 * 1024 * 1024, cap - 16 * 1024 * 1024)


@functools.lru_cache(maxsize=None)
def _single_buffer_supported():
    """Probe once whether BlockSpec(pipeline_mode=pl.Buffered(1)) lowers."""
    if not hasattr(pl, "Buffered"):
        return False

    def _k(x_ref, o_ref):
        o_ref[...] = x_ref[...]

    try:
        x = jnp.zeros((8, 128), jnp.float32)
        out = pl.pallas_call(
            _k,
            out_shape=jax.ShapeDtypeStruct((8, 128), jnp.float32),
            grid=(1,),
            in_specs=[pl.BlockSpec((8, 128), lambda i: (0, 0),
                                   pipeline_mode=pl.Buffered(1))],
            out_specs=pl.BlockSpec((8, 128), lambda i: (i, 0)),
        )(x)
        jax.block_until_ready(out)
        return True
    except Exception:
        return False


def _vmem_estimate_bytes(tb, xin_cols, hp, matmul_dtype, has_w_ih):
    """Rough VMEM footprint; sized for ~5 live [TB,4Hp] f32 slabs because the
    Mosaic scheduler is free to reorder within the basic block."""
    f4 = 4 * hp
    wbytes = 2 if matmul_dtype == jnp.bfloat16 else 4
    resident = hp * f4 * wbytes + (3 * f4 + 2 * hp) * 4
    if has_w_ih:
        resident += xin_cols * f4 * wbytes
    resident *= 2                                  # worst case: double-buffered
    tiles = 2 * 4 * tb * (xin_cols + 2 * hp)       # double-buffered input tiles
    tiles += 2 * 4 * tb * (2 * hp)                 # double-buffered output tiles
    live = 5 * 4 * tb * f4                         # live f32 [TB,4Hp] slabs
    return resident + tiles + live


def _choose_tb(batch, batch_tile, matmul_dtype, xin_cols, hp, has_w_ih):
    # bf16 packs 16 rows per vreg; keep TB a multiple of that.
    # TODO(synk): use 32 for fp8 matmul inputs.
    sub = 16 if matmul_dtype == jnp.bfloat16 else 8
    tb = max(sub, _round_up(min(batch_tile, batch), sub))
    bp = _round_up(batch, tb)
    # v7x megacore: make sure the "parallel" batch axis has >= 2 grid steps so
    # both TensorCores get work (free on single-TC v5e/v6e).
    if bp // tb < 2 and batch > sub:
        tb = _round_up(pl.cdiv(batch, 2), sub)
        bp = _round_up(batch, tb)
    # Shrink TB until the footprint estimate fits the chip's VMEM budget.
    budget = _vmem_budget_bytes()
    while tb > sub and _vmem_estimate_bytes(
            tb, xin_cols, hp, matmul_dtype, has_w_ih) > budget:
        tb = max(sub, _round_down(tb // 2, sub))
        bp = _round_up(batch, tb)
    return tb, bp


@functools.lru_cache(maxsize=None)
def _make_kernel(hidden, hidden_padded, matmul_dtype, precomputed_xproj):
    hp = hidden_padded
    inv_4h = 1.0 / float(4 * hidden)    # true (unpadded) LayerNorm divisors
    inv_h = 1.0 / float(hidden)

    def _ln_norm(x, inv_n):
        # One-pass LayerNorm stats: sum and sum-of-squares are independent
        # reductions (overlap on the XLUs).  Padded lanes are exactly zero so
        # dividing by the true feature count keeps the statistics exact.
        mean = jnp.sum(x, axis=-1, keepdims=True) * inv_n
        ex2 = jnp.sum(x * x, axis=-1, keepdims=True) * inv_n
        var = jnp.maximum(ex2 - mean * mean, 0.0)
        return (x - mean) * jax.lax.rsqrt(var + LN_EPS)

    def _finish(ni, hproj, cx, g_ih_ref, b_sum_ref, ln_c_ref, hy_ref, cy_ref):
        g_ih = g_ih_ref[...]
        nh = _ln_norm(hproj, inv_4h)
        # b_i + b_h folded into b_sum, applied once.
        pre = ni * g_ih[0:1, :] + nh * g_ih[1:2, :] + b_sum_ref[...]
        # sigmoid(x) = 0.5*tanh(0.5x) + 0.5  (one EUP transcendental).
        gates = 0.5 * jnp.tanh(0.5 * pre) + 0.5
        ingate = gates[:, 0 * hp:1 * hp]
        forgetgate = gates[:, 1 * hp:2 * hp]
        cellgate = gates[:, 2 * hp:3 * hp]
        outgate = gates[:, 3 * hp:4 * hp]
        cell = forgetgate * cx + (cellgate - ingate)
        ln_c = ln_c_ref[...]
        cy = _ln_norm(cell, inv_h) * ln_c[0:1, :] + ln_c[1:2, :]
        hy = jnp.tanh(cy) - outgate
        hy_ref[...] = hy.astype(hy_ref.dtype)
        cy_ref[...] = cy.astype(cy_ref.dtype)

    if precomputed_xproj:
        def kernel(xp_ref, hx_ref, cx_ref, w_hh_t_ref,
                   g_ih_ref, b_sum_ref, ln_c_ref, hy_ref, cy_ref):
            hx = hx_ref[...]
            if matmul_dtype is not None:
                hx = hx.astype(matmul_dtype)          # in-kernel cast
            ni = _ln_norm(xp_ref[...].astype(jnp.float32), inv_4h)
            hproj = jnp.dot(hx, w_hh_t_ref[...],
                            preferred_element_type=jnp.float32)
            _finish(ni, hproj, cx_ref[...].astype(jnp.float32),
                    g_ih_ref, b_sum_ref, ln_c_ref, hy_ref, cy_ref)
    else:
        def kernel(x_ref, hx_ref, cx_ref, w_ih_t_ref, w_hh_t_ref,
                   g_ih_ref, b_sum_ref, ln_c_ref, hy_ref, cy_ref):
            x = x_ref[...]
            hx = hx_ref[...]
            if matmul_dtype is not None:
                x = x.astype(matmul_dtype)            # in-kernel casts
                hx = hx.astype(matmul_dtype)
            xproj = jnp.dot(x, w_ih_t_ref[...],
                            preferred_element_type=jnp.float32)
            ni = _ln_norm(xproj, inv_4h)
            hproj = jnp.dot(hx, w_hh_t_ref[...],
                            preferred_element_type=jnp.float32)
            _finish(ni, hproj, cx_ref[...].astype(jnp.float32),
                    g_ih_ref, b_sum_ref, ln_c_ref, hy_ref, cy_ref)

    return kernel


def init_params(key, input_size, hidden_size):
    k_ih, k_hh = jax.random.split(key)
    return {
        # torch.randn init for the projections (PyTorch layout [4H, *]).
        "weight_ih": jax.random.normal(k_ih, (4 * hidden_size, input_size), jnp.float32),
        "weight_hh": jax.random.normal(k_hh, (4 * hidden_size, hidden_size), jnp.float32),
        # nn.LayerNorm default init: weight=1, bias=0
        "ln_i_weight": jnp.ones((4 * hidden_size,), jnp.float32),
        "ln_i_bias": jnp.zeros((4 * hidden_size,), jnp.float32),
        "ln_h_weight": jnp.ones((4 * hidden_size,), jnp.float32),
        "ln_h_bias": jnp.zeros((4 * hidden_size,), jnp.float32),
        "ln_c_weight": jnp.ones((hidden_size,), jnp.float32),
        "ln_c_bias": jnp.zeros((hidden_size,), jnp.float32),
    }


def prepare_params(params, *, matmul_dtype=None):
    """One-time prep (call OUTSIDE any scan / step loop).

    * Pre-transposes weights to [I, 4Hp] / [Hp, 4Hp].
    * Pads each gate's hidden width H to Hp = round_up(H, 128) with zero weight
      columns and zero LN gamma/beta -> lane-aligned gate slices and lane-dense
      hy/cy stores; exact because LN divisors in the kernel use the true 4H/H.
    * Folds the two 4H LayerNorm biases into one b_sum and packs the gammas.
    * Optionally casts the weights ONCE to `matmul_dtype` (e.g. jnp.bfloat16)
      -- beneficial on all generations, including v5e (bf16-native MXU);
      elementwise / LayerNorm math in the kernel stays f32.
    """
    if matmul_dtype is not None:
        matmul_dtype = jnp.dtype(matmul_dtype)

    w_ih = jnp.asarray(params["weight_ih"], jnp.float32)    # [4H, I]
    w_hh = jnp.asarray(params["weight_hh"], jnp.float32)    # [4H, H]
    four_h, input_size = w_ih.shape
    hidden = w_hh.shape[1]
    assert four_h == 4 * hidden
    hp = _round_up(hidden, LANE)
    pad = hp - hidden

    def pad_gate_rows(w):                                    # [4H, K] -> [4Hp, K]
        k = w.shape[1]
        return jnp.pad(w.reshape(4, hidden, k),
                       ((0, 0), (0, pad), (0, 0))).reshape(4 * hp, k)

    def pad_gate_vec(v):                                     # [4H] -> [4Hp]
        v = jnp.asarray(v, jnp.float32).reshape(4, hidden)
        return jnp.pad(v, ((0, 0), (0, pad))).reshape(4 * hp)

    w_ih_t = pad_gate_rows(w_ih).T                                      # [I, 4Hp]
    w_hh_t = jnp.pad(pad_gate_rows(w_hh), ((0, 0), (0, pad))).T         # [Hp, 4Hp]

    # If f32 resident weights would not fit comfortably in VMEM (v7x: 64 MiB),
    # fall back to bf16 weights.
    # TODO(synk): for very wide models, stream (tk, 4Hp) weight blocks over an
    # inner "arbitrary" K grid axis into a VMEM accumulator instead.
    if matmul_dtype is None:
        if 4 * (w_ih_t.size + w_hh_t.size) > 48 * 1024 * 1024:
            matmul_dtype = jnp.dtype(jnp.bfloat16)
    if matmul_dtype is not None:
        w_ih_t = w_ih_t.astype(matmul_dtype)
        w_hh_t = w_hh_t.astype(matmul_dtype)

    g_i = pad_gate_vec(params["ln_i_weight"])
    g_h = pad_gate_vec(params["ln_h_weight"])
    b_sum = pad_gate_vec(params["ln_i_bias"]) + pad_gate_vec(params["ln_h_bias"])
    g_c = jnp.pad(jnp.asarray(params["ln_c_weight"], jnp.float32), (0, pad))
    b_c = jnp.pad(jnp.asarray(params["ln_c_bias"], jnp.float32), (0, pad))

    return {
        "weight_ih_t": w_ih_t,                               # [I, 4Hp]
        "weight_hh_t": w_hh_t,                               # [Hp, 4Hp]
        "g_ih": jnp.stack([g_i, g_h], axis=0),               # [2, 4Hp]
        "b_sum": b_sum.reshape(1, 4 * hp),                   # [1, 4Hp]
        "ln_c": jnp.stack([g_c, b_c], axis=0),               # [2, Hp]
        "input_size": input_size,
        "hidden_size": hidden,
        "hidden_padded": hp,
        "matmul_dtype": matmul_dtype,
    }


def _run_cell(x_in, hx_p, cx_p, prepared, *, precomputed, batch_tile,
              out_dtype, tb=None):
    """x_in: [B, I] (or [B, 4Hp] pre-projected); hx_p/cx_p: [B, Hp] (padded)."""
    global _BUFFERED_RESIDENTS_OK
    hidden = prepared["hidden_size"]
    hp = prepared["hidden_padded"]
    mm_dtype = prepared["matmul_dtype"]
    batch = hx_p.shape[0]
    xin_cols = x_in.shape[1]

    if tb is None:
        tb, bp = _choose_tb(batch, batch_tile, mm_dtype, xin_cols, hp,
                            has_w_ih=not precomputed)
    else:
        bp = _round_up(batch, tb)
    if bp != batch:
        padr = bp - batch
        x_in = jnp.pad(x_in, ((0, padr), (0, 0)))
        hx_p = jnp.pad(hx_p, ((0, padr), (0, 0)))
        cx_p = jnp.pad(cx_p, ((0, padr), (0, 0)))

    kernel = _make_kernel(hidden, hp, mm_dtype, precomputed)

    args = [x_in, hx_p, cx_p]
    if not precomputed:
        args.append(prepared["weight_ih_t"])
    args += [prepared["weight_hh_t"], prepared["g_ih"], prepared["b_sum"],
             prepared["ln_c"]]

    def _call(single_buffer_residents):
        def batched(cols):
            return pl.BlockSpec((tb, cols), lambda i: (i, 0))

        def resident(rows, cols):
            # Constant block index: single-buffer when supported so resident
            # weights do not cost 2x their size in VMEM (matters on v7x).
            if single_buffer_residents:
                return pl.BlockSpec((rows, cols), lambda i: (0, 0),
                                    pipeline_mode=pl.Buffered(1))
            return pl.BlockSpec((rows, cols), lambda i: (0, 0))

        in_specs = [batched(xin_cols), batched(hp), batched(hp)]
        if not precomputed:
            in_specs.append(resident(prepared["input_size"], 4 * hp))
        in_specs += [resident(hp, 4 * hp), resident(2, 4 * hp),
                     resident(1, 4 * hp), resident(2, hp)]
        out_specs = (batched(hp), batched(hp))

        return pl.pallas_call(
            kernel,
            out_shape=(jax.ShapeDtypeStruct((bp, hp), out_dtype),
                       jax.ShapeDtypeStruct((bp, hp), out_dtype)),
            grid=(bp // tb,),
            in_specs=in_specs,
            out_specs=out_specs,
            compiler_params=pltpu.CompilerParams(
                dimension_semantics=("parallel",),
                vmem_limit_bytes=int(_vmem_budget_bytes()),
            ),
        )(*args)

    if _BUFFERED_RESIDENTS_OK and _single_buffer_supported():
        try:
            hy, cy = _call(True)
        except Exception:
            _BUFFERED_RESIDENTS_OK = False
            hy, cy = _call(False)
    else:
        hy, cy = _call(False)

    if bp != batch:
        hy = hy[:batch]
        cy = cy[:batch]
    return hy, cy


def sublstm_cell_forward(x, state, prepared, *, batch_tile=512):
    """Pallas-backed forward of LayerNormSubLSTMCell.

    x: [B, input_size]; state = (hx [B, H], cx [B, H]); prepared = output of
    prepare_params.  Returns (hy, (hy, cy)) -- the PyTorch cell's intended
    output (its `return hy(hy, cy)` is a typo for `return hy, (hy, cy)`).
    """
    hx, cx = state
    hidden = prepared["hidden_size"]
    hp = prepared["hidden_padded"]
    out_dtype = x.dtype
    if hp != hidden:
        fpad = hp - hidden
        hx = jnp.pad(hx, ((0, 0), (0, fpad)))
        cx = jnp.pad(cx, ((0, 0), (0, fpad)))
    hy, cy = _run_cell(x, hx, cx, prepared, precomputed=False,
                       batch_tile=batch_tile, out_dtype=out_dtype)
    if hp != hidden:
        hy = hy[:, :hidden]
        cy = cy[:, :hidden]
    # TODO(synk): re-introduce input_output_aliases (hx->hy, cx->cy) once a
    # padded-state scan driver keeps state in the padded layout end-to-end.
    return hy, (hy, cy)


def sublstm_sequence_forward(xs, state, prepared, *, batch_tile=512):
    """Run the cell over a [T, B, I] sequence.

    x @ W_ih.T for ALL timesteps is hoisted into one big matmul outside the
    per-step kernel (one MXU-efficient GEMM instead of T skinny ones; W_ih
    leaves the per-step VMEM footprint), and state padding happens once
    outside the lax.scan.  Returns (hy_seq [T, B, H], (h_T, c_T)).
    """
    hx, cx = state
    t_steps, batch, input_size = xs.shape
    hidden = prepared["hidden_size"]
    hp = prepared["hidden_padded"]
    mm_dtype = prepared["matmul_dtype"]
    out_dtype = hx.dtype

    w_ih_t = prepared["weight_ih_t"]                          # [I, 4Hp]
    xs_mm = xs.astype(w_ih_t.dtype) if mm_dtype is not None else xs
    xproj = jnp.dot(xs_mm.reshape(t_steps * batch, input_size), w_ih_t,
                    preferred_element_type=jnp.float32)
    xproj = xproj.reshape(t_steps, batch, 4 * hp)

    if hp != hidden:
        fpad = hp - hidden
        hx = jnp.pad(hx, ((0, 0), (0, fpad)))
        cx = jnp.pad(cx, ((0, 0), (0, fpad)))

    tb, bp = _choose_tb(batch, batch_tile, mm_dtype, 4 * hp, hp, has_w_ih=False)
    if bp != batch:
        padr = bp - batch
        hx = jnp.pad(hx, ((0, padr), (0, 0)))
        cx = jnp.pad(cx, ((0, padr), (0, 0)))
        xproj = jnp.pad(xproj, ((0, 0), (0, padr), (0, 0)))

    def step(carry, xp_t):
        h, c = carry
        hy, cy = _run_cell(xp_t, h, c, prepared, precomputed=True,
                           batch_tile=batch_tile, out_dtype=out_dtype, tb=tb)
        return (hy, cy), hy

    (h_t, c_t), ys = jax.lax.scan(step, (hx, cx), xproj)
    return ys[:, :batch, :hidden], (h_t[:batch, :hidden], c_t[:batch, :hidden])


def _reference_forward(x, state, params):
    """Pure-JAX mirror of the PyTorch module (two-pass LN, true sigmoid)."""
    hx, cx = state
    hidden = cx.shape[1]

    def ln(v, g, b):
        m = jnp.mean(v, axis=-1, keepdims=True)
        c = v - m
        var = jnp.mean(c * c, axis=-1, keepdims=True)
        return c / jnp.sqrt(var + LN_EPS) * g + b

    igates = ln(x @ params["weight_ih"].T, params["ln_i_weight"], params["ln_i_bias"])
    hgates = ln(hx @ params["weight_hh"].T, params["ln_h_weight"], params["ln_h_bias"])
    gates = jax.nn.sigmoid(igates + hgates)
    ingate = gates[:, 0:hidden]
    forgetgate = gates[:, hidden:2 * hidden]
    cellgate = gates[:, 2 * hidden:3 * hidden]
    outgate = gates[:, 3 * hidden:4 * hidden]
    cy = ln(forgetgate * cx + (cellgate - ingate),
            params["ln_c_weight"], params["ln_c_bias"])
    hy = jnp.tanh(cy) - outgate
    return hy, (hy, cy)


if __name__ == "__main__":
    batch = 16
    input_size = 32
    hidden_size = 32     # padded to Hp=128 internally -> lane-dense gates/outputs
    seq_len = 4

    key = jax.random.PRNGKey(0)
    k_params, k_x, k_h, k_c, k_seq = jax.random.split(key, 5)

    raw_params = init_params(k_params, input_size, hidden_size)
    x = jax.random.normal(k_x, (batch, input_size), jnp.float32)
    hx = jax.random.normal(k_h, (batch, hidden_size), jnp.float32)
    cx = jax.random.normal(k_c, (batch, hidden_size), jnp.float32)

    hy_ref, (_, cy_ref) = _reference_forward(x, (hx, cx), raw_params)

    # f32 path; small batch_tile so the batch grid has 2 steps (tiling + both
    # v7x TensorCores exercised).
    prepared = prepare_params(raw_params)
    hy, (_, cy) = sublstm_cell_forward(x, (hx, cx), prepared, batch_tile=8)
    jax.block_until_ready((hy, cy))
    assert jnp.allclose(hy, hy_ref, atol=1e-4, rtol=1e-4), "hy mismatch vs reference"
    assert jnp.allclose(cy, cy_ref, atol=1e-4, rtol=1e-4), "cy mismatch vs reference"

    # bf16 MXU-input path: weights cast once in prepare_params, x/hx cast
    # inside the kernel.  Elementwise / LayerNorm math stays f32 (v5e-safe).
    prepared_bf16 = prepare_params(raw_params, matmul_dtype=jnp.bfloat16)
    hy_bf, (_, cy_bf) = sublstm_cell_forward(x, (hx, cx), prepared_bf16,
                                             batch_tile=512)
    jax.block_until_ready((hy_bf, cy_bf))
    assert jnp.allclose(hy_bf, hy_ref, atol=1e-1), "hy (bf16 matmul) diverged"
    assert jnp.allclose(cy_bf, cy_ref, atol=1e-1), "cy (bf16 matmul) diverged"

    # Sequence driver: hoisted input projection + lax.scan over the step kernel.
    xs = jax.random.normal(k_seq, (seq_len, batch, input_size), jnp.float32)
    ys, (h_t, c_t) = sublstm_sequence_forward(xs, (hx, cx), prepared, batch_tile=8)
    jax.block_until_ready(ys)
    h_r, c_r = hx, cx
    ys_ref = []
    for t in range(seq_len):
        h_r, (_, c_r) = _reference_forward(xs[t], (h_r, c_r), raw_params)
        ys_ref.append(h_r)
    ys_ref = jnp.stack(ys_ref)
    assert jnp.allclose(ys, ys_ref, atol=1e-3, rtol=1e-3), "sequence hy mismatch"
    assert jnp.allclose(h_t, h_r, atol=1e-3, rtol=1e-3), "final h mismatch"
    assert jnp.allclose(c_t, c_r, atol=1e-3, rtol=1e-3), "final c mismatch"

    print("KERNEL_OK")
</pallas_src>

<mosaic_0001>
module attributes {stable_mosaic.version = 11 : i64} {
  func.func @_k(%arg0: i32, %arg1: memref<8x128xf32, #tpu.memory_space<vmem>>, %arg2: memref<8x128xf32, #tpu.memory_space<vmem>>) attributes {dimension_semantics = [#tpu.dimension_semantics<arbitrary>], iteration_bounds = array<i64: 1>, scalar_prefetch = 0 : i64, scratch_operands = 0 : i64, tpu.core_type = #tpu.core_type<tc>, window_params = [{pipeline_mode = #tpu.pipeline_mode<synchronous>, transform_indices = @transform_0, window_bounds = array<i64: 8, 128>}, {transform_indices = @transform_1, window_bounds = array<i64: 8, 128>}]} {
    %c0 = arith.constant 0 : index
    %c0_0 = arith.constant 0 : index
    %0 = vector.load %arg1[%c0, %c0_0] : memref<8x128xf32, #tpu.memory_space<vmem>>, vector<8x128xf32>
    %c0_1 = arith.constant 0 : index
    %c0_2 = arith.constant 0 : index
    %1 = vector.load %arg2[%c0_1, %c0_2] : memref<8x128xf32, #tpu.memory_space<vmem>>, vector<8x128xf32>
    tpu.vector_store %arg2[%c0_1, %c0_2], %0 {strides = array<i32>} : memref<8x128xf32, #tpu.memory_space<vmem>>, vector<8x128xf32>,
    return
  }
  func.func @transform_0(%arg0: i32) -> (i32, i32) {
    %c0_i32 = arith.constant 0 : i32
    %c0_i32_0 = arith.constant 0 : i32
    %c0_i32_1 = arith.constant 0 : i32
    return %c0_i32, %c0_i32_0 : i32, i32
  }
  func.func @transform_1(%arg0: i32) -> (i32, i32) {
    %c0_i32 = arith.constant 0 : i32
    %c0_i32_0 = arith.constant 0 : i32
    return %arg0, %c0_i32 : i32, i32
  }
}

module attributes {stable_mosaic.version = 11 : i64} {
  func.func @kernel(%arg0: i32, %arg1: memref<8x32xf32, #tpu.memory_space<vmem>>, %arg2: memref<8x128xf32, #tpu.memory_space<vmem>>, %arg3: memref<8x128xf32, #tpu.memory_space<vmem>>, %arg4: memref<32x512xf32, #tpu.memory_space<vmem>>, %arg5: memref<128x512xf32, #tpu.memory_space<vmem>>, %arg6: memref<2x512xf32, #tpu.memory_space<vmem>>, %arg7: memref<1x512xf32, #tpu.memory_space<vmem>>, %arg8: memref<2x128xf32, #tpu.memory_space<vmem>>, %arg9: memref<8x128xf32, #tpu.memory_space<vmem>>, %arg10: memref<8x128xf32, #tpu.memory_space<vmem>>) attributes {dimension_semantics = [#tpu.dimension_semantics<parallel>], iteration_bounds = array<i64: 2>, scalar_prefetch = 0 : i64, scratch_operands = 0 : i64, tpu.core_type = #tpu.core_type<tc>, window_params = [{transform_indices = @transform_0, window_bounds = array<i64: 8, 32>}, {transform_indices = @transform_1, window_bounds = array<i64: 8, 128>}, {transform_indices = @transform_2, window_bounds = array<i64: 8, 128>}, {pipeline_mode = #tpu.pipeline_mode<synchronous>, transform_indices = @transform_3, window_bounds = array<i64: 32, 512>}, {pipeline_mode = #tpu.pipeline_mode<synchronous>, transform_indices = @transform_4, window_bounds = array<i64: 128, 512>}, {pipeline_mode = #tpu.pipeline_mode<synchronous>, transform_indices = @transform_5, window_bounds = array<i64: 2, 512>}, {pipeline_mode = #tpu.pipeline_mode<synchronous>, transform_indices = @transform_6, window_bounds = array<i64: 1, 512>}, {pipeline_mode = #tpu.pipeline_mode<synchronous>, transform_indices = @transform_7, window_bounds = array<i64: 2, 128>}, {transform_indices = @transform_8, window_bounds = array<i64: 8, 128>}, {transform_indices = @transform_9, window_bounds = array<i64: 8, 128>}]} {
    %c0 = arith.constant 0 : index
    %c0_0 = arith.constant 0 : index
    %0 = vector.load %arg1[%c0, %c0_0] : memref<8x32xf32, #tpu.memory_space<vmem>>, vector<8x32xf32>
    %c0_1 = arith.constant 0 : index
    %c0_2 = arith.constant 0 : index
    %1 = vector.load %arg2[%c0_1, %c0_2] : memref<8x128xf32, #tpu.memory_space<vmem>>, vector<8x128xf32>
    %c0_3 = arith.constant 0 : index
    %c0_4 = arith.constant 0 : index
    %2 = vector.load %arg4[%c0_3, %c0_4] : memref<32x512xf32, #tpu.memory_space<vmem>>, vector<32x512xf32>
    %cst = arith.constant dense<0.000000e+00> : vector<8x512xf32>
    %3 = tpu.matmul %0, %2, %cst {dimension_numbers = #tpu.dot_dimension_numbers<[1], [0], [0], [1], [0, 0, 1, 1], [], []>} : vector<8x32xf32>, vector<32x512xf32>, vector<8x512xf32> -> vector<8x512xf32>
    %cst_5 = arith.constant dense<0.000000e+00> : vector<8xf32>
    %4 = vector.multi_reduction <add>, %3, %cst_5 [1] : vector<8x512xf32> to vector<8xf32>
    %5 = vector.shape_cast %4 : vector<8xf32> to vector<8x1xf32>
    %cst_6 = arith.constant 7.812500e-03 : f32
    %6 = vector.broadcast %cst_6 : f32 to vector<8x1xf32>
    %7 = arith.mulf %5, %6 : vector<8x1xf32>
    %8 = arith.mulf %3, %3 : vector<8x512xf32>
    %cst_7 = arith.constant dense<0.000000e+00> : vector<8xf32>
    %9 = vector.multi_reduction <add>, %8, %cst_7 [1] : vector<8x512xf32> to vector<8xf32>
    %10 = vector.shape_cast %9 : vector<8xf32> to vector<8x1xf32>
    %cst_8 = arith.constant 7.812500e-03 : f32
    %11 = vector.broadcast %cst_8 : f32 to vector<8x1xf32>
    %12 = arith.mulf %10, %11 : vector<8x1xf32>
    %13 = arith.mulf %7, %7 : vector<8x1xf32>
    %14 = arith.subf %12, %13 : vector<8x1xf32>
    %cst_9 = arith.constant 0.000000e+00 : f32
    %15 = vector.broadcast %cst_9 : f32 to vector<8x1xf32>
    %16 = arith.maximumf %14, %15 : vector<8x1xf32>
    %17 = vector.broadcast %7 : vector<8x1xf32> to vector<8x512xf32>
    %18 = arith.subf %3, %17 : vector<8x512xf32>
    %cst_10 = arith.constant 9.99999974E-6 : f32
    %19 = vector.broadcast %cst_10 : f32 to vector<8x1xf32>
    %20 = arith.addf %16, %19 : vector<8x1xf32>
    %21 = math.rsqrt %20 : vector<8x1xf32>
    %22 = vector.broadcast %21 : vector<8x1xf32> to vector<8x512xf32>
    %23 = arith.mulf %18, %22 : vector<8x512xf32>
    %c0_11 = arith.constant 0 : index
    %c0_12 = arith.constant 0 : index
    %24 = vector.load %arg5[%c0_11, %c0_12] : memref<128x512xf32, #tpu.memory_space<vmem>>, vector<128x512xf32>
    %cst_13 = arith.constant dense<0.000000e+00> : vector<8x512xf32>
    %25 = tpu.matmul %1, %24, %cst_13 {dimension_numbers = #tpu.dot_dimension_numbers<[1], [0], [0], [1], [0, 0, 1, 1], [], []>} : vector<8x128xf32>, vector<128x512xf32>, vector<8x512xf32> -> vector<8x512xf32>
    %c0_14 = arith.constant 0 : index
    %c0_15 = arith.constant 0 : index
    %26 = vector.load %arg3[%c0_14, %c0_15] : memref<8x128xf32, #tpu.memory_space<vmem>>, vector<8x128xf32>
    %c0_16 = arith.constant 0 : index
    %c0_17 = arith.constant 0 : index
    %27 = vector.load %arg6[%c0_16, %c0_17] : memref<2x512xf32, #tpu.memory_space<vmem>>, vector<2x512xf32>
    %cst_18 = arith.constant dense<0.000000e+00> : vector<8xf32>
    %28 = vector.multi_reduction <add>, %25, %cst_18 [1] : vector<8x512xf32> to vector<8xf32>
    %29 = vector.shape_cast %28 : vector<8xf32> to vector<8x1xf32>
    %cst_19 = arith.constant 7.812500e-03 : f32
    %30 = vector.broadcast %cst_19 : f32 to vector<8x1xf32>
    %31 = arith.mulf %29, %30 : vector<8x1xf32>
    %32 = arith.mulf %25, %25 : vector<8x512xf32>
    %cst_20 = arith.constant dense<0.000000e+00> : vector<8xf32>
    %33 = vector.multi_reduction <add>, %32, %cst_20 [1] : vector<8x512xf32> to vector<8xf32>
    %34 = vector.shape_cast %33 : vector<8xf32> to vector<8x1xf32>
    %cst_21 = arith.constant 7.812500e-03 : f32
    %35 = vector.broadcast %cst_21 : f32 to vector<8x1xf32>
    %36 = arith.mulf %34, %35 : vector<8x1xf32>
    %37 = arith.mulf %31, %31 : vector<8x1xf32>
    %38 = arith.subf %36, %37 : vector<8x1xf32>
    %cst_22 = arith.constant 0.000000e+00 : f32
    %39 = vector.broadcast %cst_22 : f32 to vector<8x1xf32>
    %40 = arith.maximumf %38, %39 : vector<8x1xf32>
    %41 = vector.broadcast %31 : vector<8x1xf32> to vector<8x512xf32>
    %42 = arith.subf %25, %41 : vector<8x512xf32>
    %cst_23 = arith.constant 9.99999974E-6 : f32
    %43 = vector.broadcast %cst_23 : f32 to vector<8x1xf32>
    %44 = arith.addf %40, %43 : vector<8x1xf32>
    %45 = math.rsqrt %44 : vector<8x1xf32>
    %46 = vector.broadcast %45 : vector<8x1xf32> to vector<8x512xf32>
    %47 = arith.mulf %42, %46 : vector<8x512xf32>
    %48 = vector.extract_strided_slice %27 {offsets = [0, 0], sizes = [1, 512], strides = [1, 1]} : vector<2x512xf32> to vector<1x512xf32>
    %49 = vector.broadcast %48 : vector<1x512xf32> to vector<8x512xf32>
    %50 = arith.mulf %23, %49 : vector<8x512xf32>
    %51 = vector.extract_strided_slice %27 {offsets = [1, 0], sizes = [1, 512], strides = [1, 1]} : vector<2x512xf32> to vector<1x512xf32>
    %52 = vector.broadcast %51 : vector<1x512xf32> to vector<8x512xf32>
    %53 = arith.mulf %47, %52 : vector<8x512xf32>
    %54 = arith.addf %50, %53 : vector<8x512xf32>
    %c0_24 = arith.constant 0 : index
    %c0_25 = arith.constant 0 : index
    %55 = vector.load %arg7[%c0_24, %c0_25] : memref<1x512xf32, #tpu.memory_space<vmem>>, vector<1x512xf32>
    %56 = vector.broadcast %55 : vector<1x512xf32> to vector<8x512xf32>
    %57 = arith.addf %54, %56 : vector<8x512xf32>
    %cst_26 = arith.constant 5.000000e-01 : f32
    %58 = vector.broadcast %cst_26 : f32 to vector<8x512xf32>
    %59 = arith.mulf %58, %57 : vector<8x512xf32>
    %60 = math.tanh %59 : vector<8x512xf32>
    %cst_27 = arith.constant 5.000000e-01 : f32
    %61 = vector.broadcast %cst_27 : f32 to vector<8x512xf32>
    %62 = arith.mulf %61, %60 : vector<8x512xf32>
    %cst_28 = arith.constant 5.000000e-01 : f32
    %63 = vector.broadcast %cst_28 : f32 to vector<8x512xf32>
    %64 = arith.addf %62, %63 : vector<8x512xf32>
    %65 = vector.extract_strided_slice %64 {offsets = [0, 0], sizes = [8, 128], strides = [1, 1]} : vector<8x512xf32> to vector<8x128xf32>
    %66 = vector.extract_strided_slice %64 {offsets = [0, 128], sizes = [8, 128], strides = [1, 1]} : vector<8x512xf32> to vector<8x128xf32>
    %67 = vector.extract_strided_slice %64 {offsets = [0, 256], sizes = [8, 128], strides = [1, 1]} : vector<8x512xf32> to vector<8x128xf32>
    %68 = vector.extract_strided_slice %64 {offsets = [0, 384], sizes = [8, 128], strides = [1, 1]} : vector<8x512xf32> to vector<8x128xf32>
    %69 = arith.mulf %66, %26 : vector<8x128xf32>
    %70 = arith.subf %67, %65 : vector<8x128xf32>
    %71 = arith.addf %69, %70 : vector<8x128xf32>
    %c0_29 = arith.constant 0 : index
    %c0_30 = arith.constant 0 : index
    %72 = vector.load %arg8[%c0_29, %c0_30] : memref<2x128xf32, #tpu.memory_space<vmem>>, vector<2x128xf32>
    %cst_31 = arith.constant dense<0.000000e+00> : vector<8xf32>
    %73 = vector.multi_reduction <add>, %71, %cst_31 [1] : vector<8x128xf32> to vector<8xf32>
    %74 = vector.shape_cast %73 : vector<8xf32> to vector<8x1xf32>
    %cst_32 = arith.constant 3.125000e-02 : f32
    %75 = vector.broadcast %cst_32 : f32 to vector<8x1xf32>
    %76 = arith.mulf %74, %75 : vector<8x1xf32>
    %77 = arith.mulf %71, %71 : vector<8x128xf32>
    %cst_33 = arith.constant dense<0.000000e+00> : vector<8xf32>
    %78 = vector.multi_reduction <add>, %77, %cst_33 [1] : vector<8x128xf32> to vector<8xf32>
    %79 = vector.shape_cast %78 : vector<8xf32> to vector<8x1xf32>
    %cst_34 = arith.constant 3.125000e-02 : f32
    %80 = vector.broadcast %cst_34 : f32 to vector<8x1xf32>
    %81 = arith.mulf %79, %80 : vector<8x1xf32>
    %82 = arith.mulf %76, %76 : vector<8x1xf32>
    %83 = arith.subf %81, %82 : vector<8x1xf32>
    %cst_35 = arith.constant 0.000000e+00 : f32
    %84 = vector.broadcast %cst_35 : f32 to vector<8x1xf32>
    %85 = arith.maximumf %83, %84 : vector<8x1xf32>
    %86 = vector.broadcast %76 : vector<8x1xf32> to vector<8x128xf32>
    %87 = arith.subf %71, %86 : vector<8x128xf32>
    %cst_36 = arith.constant 9.99999974E-6 : f32
    %88 = vector.broadcast %cst_36 : f32 to vector<8x1xf32>
    %89 = arith.addf %85, %88 : vector<8x1xf32>
    %90 = math.rsqrt %89 : vector<8x1xf32>
    %91 = vector.broadcast %90 : vector<8x1xf32> to vector<8x128xf32>
    %92 = arith.mulf %87, %91 : vector<8x128xf32>
    %93 = vector.extract_strided_slice %72 {offsets = [0, 0], sizes = [1, 128], strides = [1, 1]} : vector<2x128xf32> to vector<1x128xf32>
    %94 = vector.broadcast %93 : vector<1x128xf32> to vector<8x128xf32>
    %95 = arith.mulf %92, %94 : vector<8x128xf32>
    %96 = vector.extract_strided_slice %72 {offsets = [1, 0], sizes = [1, 128], strides = [1, 1]} : vector<2x128xf32> to vector<1x128xf32>
    %97 = vector.broadcast %96 : vector<1x128xf32> to vector<8x128xf32>
    %98 = arith.addf %95, %97 : vector<8x128xf32>
    %99 = math.tanh %98 : vector<8x128xf32>
    %100 = arith.subf %99, %68 : vector<8x128xf32>
    %c0_37 = arith.constant 0 : index
    %c0_38 = arith.constant 0 : index
    %101 = vector.load %arg9[%c0_37, %c0_38] : memref<8x128xf32, #tpu.memory_space<vmem>>, vector<8x128xf32>
    tpu.vector_store %arg9[%c0_37, %c0_38], %100 {strides = array<i32>} : memref<8x128xf32, #tpu.memory_space<vmem>>, vector<8x128xf32>,
    %c0_39 = arith.constant 0 : index
    %c0_40 = arith.constant 0 : index
    %102 = vector.load %arg10[%c0_39, %c0_40] : memref<8x128xf32, #tpu.memory_space<vmem>>, vector<8x128xf32>
    tpu.vector_store %arg10[%c0_39, %c0_40], %98 {strides = array<i32>} : memref<8x128xf32, #tpu.memory_space<vmem>>, vector<8x128xf32>,
    return
  }
  func.func @transform_0(%arg0: i32) -> (i32, i32) {
    %c0_i32 = arith.constant 0 : i32
    %c0_i32_0 = arith.constant 0 : i32
    return %arg0, %c0_i32 : i32, i32
  }
  func.func @transform_1(%arg0: i32) -> (i32, i32) {
    %c0_i32 = arith.constant 0 : i32
    %c0_i32_0 = arith.constant 0 : i32
    return %arg0, %c0_i32 : i32, i32
  }
  func.func @transform_2(%arg0: i32) -> (i32, i32) {
    %c0_i32 = arith.constant 0 : i32
    %c0_i32_0 = arith.constant 0 : i32
    return %arg0, %c0_i32 : i32, i32
  }
  func.func @transform_3(%arg0: i32) -> (i32, i32) {
    %c0_i32 = arith.constant 0 : i32
    %c0_i32_0 = arith.constant 0 : i32
    %c0_i32_1 = arith.constant 0 : i32
    return %c0_i32, %c0_i32_0 : i32, i32
  }
  func.func @transform_4(%arg0: i32) -> (i32, i32) {
    %c0_i32 = arith.constant 0 : i32
    %c0_i32_0 = arith.constant 0 : i32
    %c0_i32_1 = arith.constant 0 : i32
    return %c0_i32, %c0_i32_0 : i32, i32
  }
  func.func @transform_5(%arg0: i32) -> (i32, i32) {
    %c0_i32 = arith.constant 0 : i32
    %c0_i32_0 = arith.constant 0 : i32
    %c0_i32_1 = arith.constant 0 : i32
    return %c0_i32, %c0_i32_0 : i32, i32
  }
  func.func @transform_6(%arg0: i32) -> (i32, i32) {
    %c0_i32 = arith.constant 0 : i32
    %c0_i32_0 = arith.constant 0 : i32
    %c0_i32_1 = arith.constant 0 : i32
    return %c0_i32, %c0_i32_0 : i32, i32
  }
  func.func @transform_7(%arg0: i32) -> (i32, i32) {
    %c0_i32 = arith.constant 0 : i32
    %c0_i32_0 = arith.constant 0 : i32
    %c0_i32_1 = arith.constant 0 : i32
    return %c0_i32, %c0_i32_0 : i32, i32
  }
  func.func @transform_8(%arg0: i32) -> (i32, i32) {
    %c0_i32 = arith.constant 0 : i32
    %c0_i32_0 = arith.constant 0 : i32
    return %arg0, %c0_i32 : i32, i32
  }
  func.func @transform_9(%arg0: i32) -> (i32, i32) {
    %c0_i32 = arith.constant 0 : i32
    %c0_i32_0 = arith.constant 0 : i32
    return %arg0, %c0_i32 : i32, i32
  }
}

</mosaic_0001>

<llo_original>
// kernel: tpu_custom_call.1
$region0: #{tpu_custom_call.1}
  #allocation0 [shape = 'u32[]', space=smem, size = 0x4, offset = 0x4, fixed_abs, tag = 'smem constant byte address 0x4 - core index']
  #allocation1 [shape = 'u32[144,128]{1,0:T(1,128)}', space=vmem, size = 0x12000, scoped, tag = 'internal scratch']
  %s0 = inlined_call_operand.hbm [shape: f32[8,128], index: 0, kind: input, shape index: {}]
  %s1 = inlined_call_operand.hbm [shape: f32[8,128], index: 1, kind: output, shape index: {}]
  %s2 = sld [smem:[#allocation0]]
  $region18: #{tpu_custom_call.1} parent=0
    _
  %s4 = ssub.s32 1, %s2
  %s5 = scalar_select 0, %s4, %s2
  $region1: #{tpu_custom_call.1} parent=0
    #allocation2 [shape = 'u8[4096]{0}', space=vmem, size = 0x1000, scoped, tag = 'input window, operand 0, single buffered']
    #allocation3 [shape = 's32[1]{0}', space=sflag, size = 0x4, scoped, tag = 'scoped memory for tpu_custom_call.1']
    #allocation4 [shape = 's32[1]{0}', space=sflag, size = 0x4, scoped, tag = 'scoped memory for tpu_custom_call.1']
    #allocation5 [shape = 'u8[4096]{0}', space=vmem, size = 0x1000, scoped, tag = 'output window, operand 0, single buffered']
    %6 = vsyncpa [#allocation3], 0
    %7 = vsyncpa [#allocation4], 0
    // Predicated region
    $region2: #{tpu_custom_call.1} parent=1 // pred_check
      _
    $region3: #{tpu_custom_call.1} parent=1 // pred_check_branch
      %9 = sbr.rel (0) target = $region5
    $region4: #{tpu_custom_call.1} parent=1 // pred_region
      %s11 = ssub.s32 128, 128
      %12 = vsyncadd [#allocation3], %s11
      %s14 = sshll.u32 [#allocation2], 4
      %s15 = int_to_ptr.vmem [resolvable:$true] %s14
      %17 = dma.hbm_to_vmem [thread:$0]  %s0, 128, %s15, [#allocation3]
    $region5: #{tpu_custom_call.1} parent=1 // pred_fallthru
      _
    // Predicated region
    $region6: #{tpu_custom_call.1} parent=1 // pred_check
      _
    $region7: #{tpu_custom_call.1} parent=1 // pred_check_branch
      %19 = sbr.rel (0) target = $region9
    $region8: #{tpu_custom_call.1} parent=1 // pred_region
      %20 = dma.done [#allocation3], 128
    $region9: #{tpu_custom_call.1} parent=1 // pred_fallthru
      _
    %v21 = vld [vmem:[#allocation2] sm:$0xff]
    %22 = vst [vmem:[#allocation5] sm:$0xff] %v21
    // Predicated region
    $region10: #{tpu_custom_call.1} parent=1 // pred_check
      _
    $region11: #{tpu_custom_call.1} parent=1 // pred_check_branch
      %24 = sbr.rel (0) target = $region13
    $region12: #{tpu_custom_call.1} parent=1 // pred_region
      %s26 = ssub.s32 128, 128
      %27 = vsyncadd [#allocation4], %s26
      %s29 = sshll.u32 [#allocation5], 4
      %s30 = int_to_ptr.vmem [resolvable:$true] %s29
      %32 = dma.vmem_to_hbm [thread:$0]  %s30, 128, %s1, [#allocation4]
    $region13: #{tpu_custom_call.1} parent=1 // pred_fallthru
      _
    // Predicated region
    $region14: #{tpu_custom_call.1} parent=1 // pred_check
      _
    $region15: #{tpu_custom_call.1} parent=1 // pred_check_branch
      %34 = sbr.rel (0) target = $region17
    $region16: #{tpu_custom_call.1} parent=1 // pred_region
      %35 = dma.done [#allocation4], 128
    $region17: #{tpu_custom_call.1} parent=1 // pred_fallthru
      _
    %36 = vsyncpa [#allocation3], 1
    %37 = vsyncpa [#allocation4], 1

// kernel: tpu_custom_call.1
$region0: #{tpu_custom_call.1}
  #allocation0 [shape = 'u32[]', space=smem, size = 0x4, offset = 0x4, fixed_abs, tag = 'smem constant byte address 0x4 - core index']
  #allocation1 [shape = 'u32[144,128]{1,0:T(1,128)}', space=vmem, size = 0x12000, scoped, tag = 'internal scratch']
  %s0 = inlined_call_operand.hbm [shape: f32[16,32], index: 0, kind: input, shape index: {}]
  %s1 = inlined_call_operand.hbm [shape: f32[16,128], index: 1, kind: input, shape index: {}]
  %s2 = inlined_call_operand.hbm [shape: f32[16,128], index: 2, kind: input, shape index: {}]
  %s3 = inlined_call_operand.hbm [shape: f32[32,512], index: 3, kind: input, shape index: {}]
  %s4 = inlined_call_operand.hbm [shape: f32[128,512], index: 4, kind: input, shape index: {}]
  %s5 = inlined_call_operand.vmem [shape: f32[2,512], index: 5, kind: input, shape index: {}]
  %s6 = inlined_call_operand.vmem [shape: f32[1,512], index: 6, kind: input, shape index: {}]
  %s7 = inlined_call_operand.vmem [shape: f32[2,128], index: 7, kind: input, shape index: {}]
  %s8 = inlined_call_operand.hbm [shape: f32[16,128], index: 8, kind: output, shape index: {0}]
  %s9 = inlined_call_operand.hbm [shape: f32[16,128], index: 9, kind: output, shape index: {1}]
  %10 = xla_tuple %s8, %s9
  %s11 = sld [smem:[#allocation0]]
  $region93: #{tpu_custom_call.1} parent=0
    _
  %s13 = ssub.s32 1, %s11
  %s14 = scalar_select 0, %s13, %s11
  $region1: #{tpu_custom_call.1} parent=0
    #allocation2 [shape = 'u8[8192]{0}', space=vmem, size = 0x2000, scoped, tag = 'input window, operand 0']
    #allocation3 [shape = 's32[2]{0}', space=sflag, size = 0x8, scoped, tag = 'scoped memory for tpu_custom_call.1']
    #allocation4 [shape = 's32[2]{0}', space=sflag, size = 0x8, scoped, tag = 'scoped memory for tpu_custom_call.1']
    #allocation5 [shape = 'u8[8192]{0}', space=vmem, size = 0x2000, scoped, tag = 'input window, operand 1']
    #allocation6 [shape = 's32[2]{0}', space=sflag, size = 0x8, scoped, tag = 'scoped memory for tpu_custom_call.1']
    #allocation7 [shape = 'u8[8192]{0}', space=vmem, size = 0x2000, scoped, tag = 'input window, operand 2']
    #allocation8 [shape = 'u8[65536]{0}', space=vmem, size = 0x10000, scoped, tag = 'input window, operand 3, single buffered']
    #allocation9 [shape = 's32[1]{0}', space=sflag, size = 0x4, scoped, tag = 'scoped memory for tpu_custom_call.1']
    #allocation10 [shape = 'u8[262144]{0}', space=vmem, size = 0x40000, scoped, tag = 'input window, operand 4, single buffered']
    #allocation11 [shape = 'u8[8192]{0}', space=vmem, size = 0x2000, scoped, tag = 'output window, operand 0']
    #allocation12 [shape = 'u8[8192]{0}', space=vmem, size = 0x2000, scoped, tag = 'output window, operand 1']
    #allocation13 [shape = 's32[2]{0}', space=sflag, size = 0x8, scoped, tag = 'scoped memory for tpu_custom_call.1']
    %15 = vsyncpa [#allocation3], 0
    %s16 = scalar_lea.sflag [#allocation3], 1
    %17 = vsyncpa %s16, 0
    %18 = vsyncpa [#allocation6], 0
    %s19 = scalar_lea.sflag [#allocation6], 1
    %20 = vsyncpa %s19, 0
    %21 = vsyncpa [#allocation9], 0
    %22 = vsyncpa [#allocation4], 0
    %s23 = scalar_lea.sflag [#allocation4], 1
    %24 = vsyncpa %s23, 0
    %25 = vsyncpa [#allocation13], 0
    %s26 = scalar_lea.sflag [#allocation13], 1
    %27 = vsyncpa %s26, 0
    loop: start=0, step=1, limit=4
    $region2: #{tpu_custom_call.1} parent=1 // loop_pre_header
      _
    $region3: #{tpu_custom_call.1} parent=1 // loop_header
      %s29 = sphi 0, %s33
      %p30 = scmp.ge.s32.totalorder %s29, 4
      %s39 = sphi 0, %s41
      %s42 = sphi 0, %s39
      %s43 = sphi 0, %s42
      %s59 = sphi 0, %s43
      %s65 = sphi 0, %s67
      %s68 = sphi 0, %s65
      %s69 = sphi 0, %s68
      %s85 = sphi 0, %s69
      %s91 = sphi 0, %s93
      %s94 = sphi 0, %s91
      %s95 = sphi 0, %s94
      %s111 = sphi 0, %s95
      %s115 = sphi 0, %s115
      %s117 = sphi 0, %s115
      %s118 = sphi 0, %s117
      %s132 = sphi 0, %s118
      %s136 = sphi 0, %s136
      %s138 = sphi 0, %s136
      %s139 = sphi 0, %s138
      %s153 = sphi 0, %s139
      %s157 = sphi 0, %s157
      %s159 = sphi 0, %s157
      %s160 = sphi 0, %s159
      %s174 = sphi 0, %s160
      %s178 = sphi 0, %s178
      %s180 = sphi 0, %s178
      %s181 = sphi 0, %s180
      %s195 = sphi 0, %s181
      %s199 = sphi 0, %s199
      %s201 = sphi 0, %s199
      %s202 = sphi 0, %s201
      %s216 = sphi 0, %s202
      %s222 = sphi 0, %s224
      %s225 = sphi 0, %s222
      %s226 = sphi 0, %s225
      %s242 = sphi 0, %s226
      %s248 = sphi 0, %s250
      %s251 = sphi 0, %s248
      %s252 = sphi 0, %s251
      %s268 = sphi 0, %s252
    $region4: #{tpu_custom_call.1} parent=1 // loop_header_branch
      %32 = sbr.rel (%p30) target = $region8
    $region5: #{tpu_custom_call.1} parent=1 // loop_body
      %s34 = ssub.s32 %s29, 1
      %s35 = ssub.s32 %s29, 2
      %s36 = sadd.s32 %s29, 1
      %s37 = ssub.s32 %s29, %s36
      %p38 = scmp.eq.s32.totalorder %s37, 0
      %s40 = sadd.s32 %s39, 1
      %s41 = scalar_select %p38, %s39, %s40
      %p44 = pneg %p38
      %p45 = scmp.eq.s32.totalorder %s29, 1
      %p46 = por %p44, %p45
      %p47 = scmp.ne.s32.totalorder %s39, %s42
      %p48 = scmp.eq.s32.totalorder %s29, 0
      %p49 = por %p47, %p48
      %p50 = scmp.ne.s32.totalorder %s39, %s42
      %p51 = scmp.eq.s32.totalorder %s34, 1
      %p52 = por %p50, %p51
      %p53 = scmp.ne.s32.totalorder %s42, %s43
      %p54 = scmp.eq.s32.totalorder %s34, 0
      %p55 = por %p53, %p54
      %p56 = scmp.ne.s32.totalorder %s42, %s43
      %p57 = scmp.eq.s32.totalorder %s35, 1
      %p58 = por %p56, %p57
      %p60 = scmp.ne.s32.totalorder %s43, %s59
      %p61 = scmp.eq.s32.totalorder %s35, 0
      %p62 = por %p60, %p61
      %s63 = ssub.s32 %s29, %s36
      %p64 = scmp.eq.s32.totalorder %s63, 0
      %s66 = sadd.s32 %s65, 1
      %s67 = scalar_select %p64, %s65, %s66
      %p70 = pneg %p64
      %p71 = scmp.eq.s32.totalorder %s29, 1
      %p72 = por %p70, %p71
      %p73 = scmp.ne.s32.totalorder %s65, %s68
      %p74 = scmp.eq.s32.totalorder %s29, 0
      %p75 = por %p73, %p74
      %p76 = scmp.ne.s32.totalorder %s65, %s68
      %p77 = scmp.eq.s32.totalorder %s34, 1
      %p78 = por %p76, %p77
      %p79 = scmp.ne.s32.totalorder %s68, %s69
      %p80 = scmp.eq.s32.totalorder %s34, 0
      %p81 = por %p79, %p80
      %p82 = scmp.ne.s32.totalorder %s68, %s69
      %p83 = scmp.eq.s32.totalorder %s35, 1
      %p84 = por %p82, %p83
      %p86 = scmp.ne.s32.totalorder %s69, %s85
      %p87 = scmp.eq.s32.totalorder %s35, 0
      %p88 = por %p86, %p87
      %s89 = ssub.s32 %s29, %s36
      %p90 = scmp.eq.s32.totalorder %s89, 0
      %s92 = sadd.s32 %s91, 1
      %s93 = scalar_select %p90, %s91, %s92
      %p96 = pneg %p90
      %p97 = scmp.eq.s32.totalorder %s29, 1
      %p98 = por %p96, %p97
      %p99 = scmp.ne.s32.totalorder %s91, %s94
      %p100 = scmp.eq.s32.totalorder %s29, 0
      %p101 = por %p99, %p100
      %p102 = scmp.ne.s32.totalorder %s91, %s94
      %p103 = scmp.eq.s32.totalorder %s34, 1
      %p104 = por %p102, %p103
      %p105 = scmp.ne.s32.totalorder %s94, %s95
      %p106 = scmp.eq.s32.totalorder %s34, 0
      %p107 = por %p105, %p106
      %p108 = scmp.ne.s32.totalorder %s94, %s95
      %p109 = scmp.eq.s32.totalorder %s35, 1
      %p110 = por %p108, %p109
      %p112 = scmp.ne.s32.totalorder %s95, %s111
      %p113 = scmp.eq.s32.totalorder %s35, 0
      %p114 = por %p112, %p113
      %s116 = sadd.s32 %s115, 1
      %p119 = scmp.eq.s32.totalorder %s29, 1
      %p120 = scmp.ne.s32.totalorder %s115, %s117
      %p121 = scmp.eq.s32.totalorder %s29, 0
      %p122 = por %p120, %p121
      %p123 = scmp.ne.s32.totalorder %s115, %s117
      %p124 = scmp.eq.s32.totalorder %s34, 1
      %p125 = por %p123, %p124
      %p126 = scmp.ne.s32.totalorder %s117, %s118
      %p127 = scmp.eq.s32.totalorder %s34, 0
      %p128 = por %p126, %p127
      %p129 = scmp.ne.s32.totalorder %s117, %s118
      %p130 = scmp.eq.s32.totalorder %s35, 1
      %p131 = por %p129, %p130
      %p133 = scmp.ne.s32.totalorder %s118, %s132
      %p134 = scmp.eq.s32.totalorder %s35, 0
      %p135 = por %p133, %p134
      %s137 = sadd.s32 %s136, 1
      %p140 = scmp.eq.s32.totalorder %s29, 1
      %p141 = scmp.ne.s32.totalorder %s136, %s138
      %p142 = scmp.eq.s32.totalorder %s29, 0
      %p143 = por %p141, %p142
      %p144 = scmp.ne.s32.totalorder %s136, %s138
      %p145 = scmp.eq.s32.totalorder %s34, 1
      %p146 = por %p144, %p145
      %p147 = scmp.ne.s32.totalorder %s138, %s139
      %p148 = scmp.eq.s32.totalorder %s34, 0
      %p149 = por %p147, %p148
      %p150 = scmp.ne.s32.totalorder %s138, %s139
      %p151 = scmp.eq.s32.totalorder %s35, 1
      %p152 = por %p150, %p151
      %p154 = scmp.ne.s32.totalorder %s139, %s153
      %p155 = scmp.eq.s32.totalorder %s35, 0
      %p156 = por %p154, %p155
      %s158 = sadd.s32 %s157, 1
      %p161 = scmp.eq.s32.totalorder %s29, 1
      %p162 = scmp.ne.s32.totalorder %s157, %s159
      %p163 = scmp.eq.s32.totalorder %s29, 0
      %p164 = por %p162, %p163
      %p165 = scmp.ne.s32.totalorder %s157, %s159
      %p166 = scmp.eq.s32.totalorder %s34, 1
      %p167 = por %p165, %p166
      %p168 = scmp.ne.s32.totalorder %s159, %s160
      %p169 = scmp.eq.s32.totalorder %s34, 0
      %p170 = por %p168, %p169
      %p171 = scmp.ne.s32.totalorder %s159, %s160
      %p172 = scmp.eq.s32.totalorder %s35, 1
      %p173 = por %p171, %p172
      %p175 = scmp.ne.s32.totalorder %s160, %s174
      %p176 = scmp.eq.s32.totalorder %s35, 0
      %p177 = por %p175, %p176
      %s179 = sadd.s32 %s178, 1
      %p182 = scmp.eq.s32.totalorder %s29, 1
      %p183 = scmp.ne.s32.totalorder %s178, %s180
      %p184 = scmp.eq.s32.totalorder %s29, 0
      %p185 = por %p183, %p184
      %p186 = scmp.ne.s32.totalorder %s178, %s180
      %p187 = scmp.eq.s32.totalorder %s34, 1
      %p188 = por %p186, %p187
      %p189 = scmp.ne.s32.totalorder %s180, %s181
      %p190 = scmp.eq.s32.totalorder %s34, 0
      %p191 = por %p189, %p190
      %p192 = scmp.ne.s32.totalorder %s180, %s181
      %p193 = scmp.eq.s32.totalorder %s35, 1
      %p194 = por %p192, %p193
      %p196 = scmp.ne.s32.totalorder %s181, %s195
      %p197 = scmp.eq.s32.totalorder %s35, 0
      %p198 = por %p196, %p197
      %s200 = sadd.s32 %s199, 1
      %p203 = scmp.eq.s32.totalorder %s29, 1
      %p204 = scmp.ne.s32.totalorder %s199, %s201
      %p205 = scmp.eq.s32.totalorder %s29, 0
      %p206 = por %p204, %p205
      %p207 = scmp.ne.s32.totalorder %s199, %s201
      %p208 = scmp.eq.s32.totalorder %s34, 1
      %p209 = por %p207, %p208
      %p210 = scmp.ne.s32.totalorder %s201, %s202
      %p211 = scmp.eq.s32.totalorder %s34, 0
      %p212 = por %p210, %p211
      %p213 = scmp.ne.s32.totalorder %s201, %s202
      %p214 = scmp.eq.s32.totalorder %s35, 1
      %p215 = por %p213, %p214
      %p217 = scmp.ne.s32.totalorder %s202, %s216
      %p218 = scmp.eq.s32.totalorder %s35, 0
      %p219 = por %p217, %p218
      %s220 = ssub.s32 %s29, %s36
      %p221 = scmp.eq.s32.totalorder %s220, 0
      %s223 = sadd.s32 %s222, 1
      %s224 = scalar_select %p221, %s222, %s223
      %p227 = pneg %p221
      %p228 = scmp.eq.s32.totalorder %s29, 1
      %p229 = por %p227, %p228
      %p230 = scmp.ne.s32.totalorder %s222, %s225
      %p231 = scmp.eq.s32.totalorder %s29, 0
      %p232 = por %p230, %p231
      %p233 = scmp.ne.s32.totalorder %s222, %s225
      %p234 = scmp.eq.s32.totalorder %s34, 1
      %p235 = por %p233, %p234
      %p236 = scmp.ne.s32.totalorder %s225, %s226
      %p237 = scmp.eq.s32.totalorder %s34, 0
      %p238 = por %p236, %p237
      %p239 = scmp.ne.s32.totalorder %s225, %s226
      %p240 = scmp.eq.s32.totalorder %s35, 1
      %p241 = por %p239, %p240
      %p243 = scmp.ne.s32.totalorder %s226, %s242
      %p244 = scmp.eq.s32.totalorder %s35, 0
      %p245 = por %p243, %p244
      %s246 = ssub.s32 %s29, %s36
      %p247 = scmp.eq.s32.totalorder %s246, 0
      %s249 = sadd.s32 %s248, 1
      %s250 = scalar_select %p247, %s248, %s249
      %p253 = pneg %p247
      %p254 = scmp.eq.s32.totalorder %s29, 1
      %p255 = por %p253, %p254
      %p256 = scmp.ne.s32.totalorder %s248, %s251
      %p257 = scmp.eq.s32.totalorder %s29, 0
      %p258 = por %p256, %p257
      %p259 = scmp.ne.s32.totalorder %s248, %s251
      %p260 = scmp.eq.s32.totalorder %s34, 1
      %p261 = por %p259, %p260
      %p262 = scmp.ne.s32.totalorder %s251, %s252
      %p263 = scmp.eq.s32.totalorder %s34, 0
      %p264 = por %p262, %p263
      %p265 = scmp.ne.s32.totalorder %s251, %s252
      %p266 = scmp.eq.s32.totalorder %s35, 1
      %p267 = por %p265, %p266
      %p269 = scmp.ne.s32.totalorder %s252, %s268
      %p270 = scmp.eq.s32.totalorder %s35, 0
      %p271 = por %p269, %p270
      %p272 = scmp.le.s32.totalorder 1, %s29
      %p273 = scmp.lt.s32.totalorder %s29, 3
      %p274 = pnand %p272, %p273
      %p275 = pneg %p274
      // Predicated region
      $region9: #{tpu_custom_call.1} parent=5 // pred_check
        _
      $region10: #{tpu_custom_call.1} parent=5 // pred_check_branch
        %277 = sbr.rel (%p274) target = $region12
      $region11: #{tpu_custom_call.1} parent=5 // pred_region
        %s278 = ssub.s32 %s29, 1
        // Predicated region
        $region13: #{tpu_custom_call.1} parent=11 // pred_check
          %p279 = pneg %p128
        $region14: #{tpu_custom_call.1} parent=11 // pred_check_branch
          %281 = sbr.rel (%p279) target = $region16
        $region15: #{tpu_custom_call.1} parent=11 // pred_region
          %s283 = ssub.s32 2048, 2048
          %284 = vsyncadd [#allocation9], %s283
          %s285 = sshll.u32 [#allocation8], 4
          %s286 = int_to_ptr.vmem [resolvable:$true] %s285
          %291 = dma.hbm_to_vmem [thread:$0]  %s3, 2048, %s286, [#allocation9], 512, 512, 32
        $region16: #{tpu_custom_call.1} parent=11 // pred_fallthru
          _
        // Predicated region
        $region17: #{tpu_custom_call.1} parent=11 // pred_check
          %p292 = pneg %p149
        $region18: #{tpu_custom_call.1} parent=11 // pred_check_branch
          %294 = sbr.rel (%p292) target = $region20
        $region19: #{tpu_custom_call.1} parent=11 // pred_region
          %s296 = ssub.s32 8192, 8192
          %297 = vsyncadd [#allocation9], %s296
          %s298 = sshll.u32 [#allocation10], 4
          %s299 = int_to_ptr.vmem [resolvable:$true] %s298
          %304 = dma.hbm_to_vmem [thread:$0]  %s4, 8192, %s299, [#allocation9], 512, 512, 32
        $region20: #{tpu_custom_call.1} parent=11 // pred_fallthru
          _
        // Predicated region
        $region21: #{tpu_custom_call.1} parent=11 // pred_check
          %p305 = pneg %p170
        $region22: #{tpu_custom_call.1} parent=11 // pred_check_branch
          %307 = sbr.rel (%p305) target = $region24
        $region23: #{tpu_custom_call.1} parent=11 // pred_region
          _
        $region24: #{tpu_custom_call.1} parent=11 // pred_fallthru
          _
        // Predicated region
        $region25: #{tpu_custom_call.1} parent=11 // pred_check
          %p308 = pneg %p191
        $region26: #{tpu_custom_call.1} parent=11 // pred_check_branch
          %310 = sbr.rel (%p308) target = $region28
        $region27: #{tpu_custom_call.1} parent=11 // pred_region
          _
        $region28: #{tpu_custom_call.1} parent=11 // pred_fallthru
          _
        // Predicated region
        $region29: #{tpu_custom_call.1} parent=11 // pred_check
          %p311 = pneg %p212
        $region30: #{tpu_custom_call.1} parent=11 // pred_check_branch
          %313 = sbr.rel (%p311) target = $region32
        $region31: #{tpu_custom_call.1} parent=11 // pred_region
          _
        $region32: #{tpu_custom_call.1} parent=11 // pred_fallthru
          _
      $region12: #{tpu_custom_call.1} parent=5 // pred_fallthru
        _
      %p314 = scmp.lt.s32.totalorder %s29, 2
      // Predicated region
      $region33: #{tpu_custom_call.1} parent=5 // pred_check
        %p315 = pneg %p314
      $region34: #{tpu_custom_call.1} parent=5 // pred_check_branch
        %317 = sbr.rel (%p315) target = $region36
      $region35: #{tpu_custom_call.1} parent=5 // pred_region
        // Predicated region
        $region37: #{tpu_custom_call.1} parent=35 // pred_check
          %p318 = pneg %p49
        $region38: #{tpu_custom_call.1} parent=35 // pred_check_branch
          %320 = sbr.rel (%p318) target = $region40
        $region39: #{tpu_custom_call.1} parent=35 // pred_region
          %s321 = sand.u32 %s39, 1
          %s322 = scalar_lea.sflag [#allocation3], %s321
          %s323 = sand.u32 %s39, 1
          %s324 = smul.addr %s323, 8
          %s325 = scalar_lea.vmem [#allocation2], %s324
          %s327 = ssub.s32 128, 128
          %328 = vsyncadd %s322, %s327
          %s329 = smul.addr %s29, 128
          %s330 = scalar_lea.hbm %s0, %s329
          %s332 = sshll.u32 %s325, 4
          %s333 = int_to_ptr.vmem [resolvable:$true] %s332
          %335 = dma.hbm_to_vmem [thread:$0]  %s330, 128, %s333, %s322
        $region40: #{tpu_custom_call.1} parent=35 // pred_fallthru
          _
        // Predicated region
        $region41: #{tpu_custom_call.1} parent=35 // pred_check
          %p336 = pneg %p75
        $region42: #{tpu_custom_call.1} parent=35 // pred_check_branch
          %338 = sbr.rel (%p336) target = $region44
        $region43: #{tpu_custom_call.1} parent=35 // pred_region
          %s339 = sand.u32 %s29, 1
          %s340 = scalar_lea.sflag [#allocation6], %s339
          %s341 = sand.u32 %s65, 1
          %s342 = smul.addr %s341, 8
          %s343 = scalar_lea.vmem [#allocation5], %s342
          %s345 = ssub.s32 128, 128
          %346 = vsyncadd %s340, %s345
          %s347 = smul.addr %s29, 128
          %s348 = scalar_lea.hbm %s1, %s347
          %s350 = sshll.u32 %s343, 4
          %s351 = int_to_ptr.vmem [resolvable:$true] %s350
          %353 = dma.hbm_to_vmem [thread:$0]  %s348, 128, %s351, %s340
        $region44: #{tpu_custom_call.1} parent=35 // pred_fallthru
          _
        // Predicated region
        $region45: #{tpu_custom_call.1} parent=35 // pred_check
          %p354 = pneg %p101
        $region46: #{tpu_custom_call.1} parent=35 // pred_check_branch
          %356 = sbr.rel (%p354) target = $region48
        $region47: #{tpu_custom_call.1} parent=35 // pred_region
          %s357 = sand.u32 %s29, 1
          %s358 = scalar_lea.sflag [#allocation6], %s357
          %s359 = sand.u32 %s91, 1
          %s360 = smul.addr %s359, 8
          %s361 = scalar_lea.vmem [#allocation7], %s360
          %s363 = ssub.s32 128, 128
          %364 = vsyncadd %s358, %s363
          %s365 = smul.addr %s29, 128
          %s366 = scalar_lea.hbm %s2, %s365
          %s368 = sshll.u32 %s361, 4
          %s369 = int_to_ptr.vmem [resolvable:$true] %s368
          %371 = dma.hbm_to_vmem [thread:$0]  %s366, 128, %s369, %s358
        $region48: #{tpu_custom_call.1} parent=35 // pred_fallthru
          _
      $region36: #{tpu_custom_call.1} parent=5 // pred_fallthru
        _
      %p372 = scmp.le.s32.totalorder 1, %s29
      %p373 = scmp.lt.s32.totalorder %s29, 3
      %p374 = pnand %p372, %p373
      %p375 = pneg %p374
      // Predicated region
      $region49: #{tpu_custom_call.1} parent=5 // pred_check
        _
      $region50: #{tpu_custom_call.1} parent=5 // pred_check_branch
        %377 = sbr.rel (%p374) target = $region52
      $region51: #{tpu_custom_call.1} parent=5 // pred_region
        %s378 = ssub.s32 %s29, 1
        %s379 = sand.u32 %s42, 1
        %s380 = scalar_lea.sflag [#allocation3], %s379
        %s381 = sand.u32 %s42, 1
        %s382 = smul.addr %s381, 8
        %s383 = scalar_lea.vmem [#allocation2], %s382
        // Predicated region
        $region53: #{tpu_custom_call.1} parent=51 // pred_check
          %p384 = pneg %p55
        $region54: #{tpu_custom_call.1} parent=51 // pred_check_branch
          %386 = sbr.rel (%p384) target = $region56
        $region55: #{tpu_custom_call.1} parent=51 // pred_region
          %387 = dma.done %s380, 128
        $region56: #{tpu_custom_call.1} parent=51 // pred_fallthru
          _
        %s388 = sand.u32 %s34, 1
        %s389 = scalar_lea.sflag [#allocation6], %s388
        %s390 = sand.u32 %s68, 1
        %s391 = smul.addr %s390, 8
        %s392 = scalar_lea.vmem [#allocation5], %s391
        // Predicated region
        $region57: #{tpu_custom_call.1} parent=51 // pred_check
          %p393 = pneg %p81
        $region58: #{tpu_custom_call.1} parent=51 // pred_check_branch
          %395 = sbr.rel (%p393) target = $region60
        $region59: #{tpu_custom_call.1} parent=51 // pred_region
          %396 = dma.done %s389, 128
        $region60: #{tpu_custom_call.1} parent=51 // pred_fallthru
          _
        %s397 = sand.u32 %s34, 1
        %s398 = scalar_lea.sflag [#allocation6], %s397
        %s399 = sand.u32 %s94, 1
        %s400 = smul.addr %s399, 8
        %s401 = scalar_lea.vmem [#allocation7], %s400
        // Predicated region
        $region61: #{tpu_custom_call.1} parent=51 // pred_check
          %p402 = pneg %p107
        $region62: #{tpu_custom_call.1} parent=51 // pred_check_branch
          %404 = sbr.rel (%p402) target = $region64
        $region63: #{tpu_custom_call.1} parent=51 // pred_region
          %405 = dma.done %s398, 128
        $region64: #{tpu_custom_call.1} parent=51 // pred_fallthru
          _
        // Predicated region
        $region65: #{tpu_custom_call.1} parent=51 // pred_check
          %p406 = pneg %p128
        $region66: #{tpu_custom_call.1} parent=51 // pred_check_branch
          %408 = sbr.rel (%p406) target = $region68
        $region67: #{tpu_custom_call.1} parent=51 // pred_region
          %409 = dma.done [#allocation9], 2048
        $region68: #{tpu_custom_call.1} parent=51 // pred_fallthru
          _
        // Predicated region
        $region69: #{tpu_custom_call.1} parent=51 // pred_check
          %p410 = pneg %p149
        $region70: #{tpu_custom_call.1} parent=51 // pred_check_branch
          %412 = sbr.rel (%p410) target = $region72
        $region71: #{tpu_custom_call.1} parent=51 // pred_region
          %413 = dma.done [#allocation9], 8192
        $region72: #{tpu_custom_call.1} parent=51 // pred_fallthru
          _
        %s414 = sand.u32 %s42, 1
        %s415 = scalar_lea.sflag [#allocation3], %s414
        %s416 = sand.u32 %s42, 1
        %s417 = smul.addr %s416, 8
        %s418 = scalar_lea.vmem [#allocation2], %s417
        %p419 = pneg %p55
        %p420 = pneg %p52
        %s421 = sand.u32 %s34, 1
        %s422 = scalar_lea.sflag [#allocation6], %s421
        %s423 = sand.u32 %s68, 1
        %s424 = smul.addr %s423, 8
        %s425 = scalar_lea.vmem [#allocation5], %s424
        %p426 = pneg %p81
        %p427 = pneg %p78
        %s428 = sand.u32 %s34, 1
        %s429 = scalar_lea.sflag [#allocation6], %s428
        %s430 = sand.u32 %s94, 1
        %s431 = smul.addr %s430, 8
        %s432 = scalar_lea.vmem [#allocation7], %s431
        %p433 = pneg %p107
        %p434 = pneg %p104
        %p435 = pneg %p128
        %p436 = pneg %p125
        %p437 = pneg %p149
        %p438 = pneg %p146
        %p439 = pneg %p170
        %p440 = pneg %p167
        %p441 = pneg %p191
        %p442 = pneg %p188
        %p443 = pneg %p212
        %p444 = pneg %p209
        %p445 = pneg %p238
        %p446 = pneg %p235
        %s447 = sand.u32 %s225, 1
        %s448 = scalar_lea.sflag [#allocation4], %s447
        %s449 = sand.u32 %s225, 1
        %s450 = smul.addr %s449, 8
        %s451 = scalar_lea.vmem [#allocation11], %s450
        %p452 = pneg %p264
        %p453 = pneg %p261
        %s454 = sand.u32 %s251, 1
        %s455 = scalar_lea.sflag [#allocation13], %s454
        %s456 = sand.u32 %s251, 1
        %s457 = smul.addr %s456, 8
        %s458 = scalar_lea.vmem [#allocation12], %s457
        %v459 = vld [vmem:[%s383] sm:$0xff]
        %v460 = vld [vmem:[%s392] sm:$0xff]
        %v461 = vld [vmem:[#allocation8] sm:$0xff]
        %v462 = vld [vmem:[#allocation8 + $0x8] sm:$0xff]
        %v463 = vld [vmem:[#allocation8 + $0x10] sm:$0xff]
        %v464 = vld [vmem:[#allocation8 + $0x18] sm:$0xff]
        %v465 = vld [vmem:[#allocation8 + $0x20] sm:$0xff]
        %v466 = vld [vmem:[#allocation8 + $0x28] sm:$0xff]
        %v467 = vld [vmem:[#allocation8 + $0x30] sm:$0xff]
        %v468 = vld [vmem:[#allocation8 + $0x38] sm:$0xff]
        %v469 = vld [vmem:[#allocation8 + $0x40] sm:$0xff]
        %v470 = vld [vmem:[#allocation8 + $0x48] sm:$0xff]
        %v471 = vld [vmem:[#allocation8 + $0x50] sm:$0xff]
        %v472 = vld [vmem:[#allocation8 + $0x58] sm:$0xff]
        %v473 = vld [vmem:[#allocation8 + $0x60] sm:$0xff]
        %v474 = vld [vmem:[#allocation8 + $0x68] sm:$0xff]
        %v475 = vld [vmem:[#allocation8 + $0x70] sm:$0xff]
        %v476 = vld [vmem:[#allocation8 + $0x78] sm:$0xff]
        %vm477 = vcmask 261120
        %v479 = vsel %vm477, %v459, 0
        %481 = vmatprep.subr.mxu0 %v462
        %482 = vmatpush1.msra.mxu0 %v461
        %483 = vmatprep.subr.mxu0 %v466
        %484 = vmatpush1.msra.mxu0 %v465
        %485 = vmatprep.subr.mxu0 %v470
        %486 = vmatpush1.msra.mxu0 %v469
        %487 = vmatprep.subr.mxu0 %v474
        %488 = vmatpush1.msra.mxu0 %v473
        %489 = vmatprep.subr.mxu0 0.0
        %490 = vmatpush1.msra.mxu0 0.0
        %491 = vmatprep.subr.mxu0 0.0
        %492 = vmatpush1.msra.mxu0 0.0
        %493 = vmatprep.subr.mxu0 0.0
        %494 = vmatpush1.msra.mxu0 0.0
        %495 = vmatprep.subr.mxu0 0.0
        %496 = vmatpush1.msra.mxu0 0.0
        %497 = vmatprep.subr.mxu0 0.0
        %498 = vmatpush1.msra.mxu0 0.0
        %499 = vmatprep.subr.mxu0 0.0
        %500 = vmatpush1.msra.mxu0 0.0
        %501 = vmatprep.subr.mxu0 0.0
        %502 = vmatpush1.msra.mxu0 0.0
        %503 = vmatprep.subr.mxu0 0.0
        %504 = vmatpush1.msra.mxu0 0.0
        %505 = vmatprep.subr.mxu0 0.0
        %506 = vmatpush1.msra.mxu0 0.0
        %507 = vmatprep.subr.mxu0 0.0
        %508 = vmatpush1.msra.mxu0 0.0
        %509 = vmatprep.subr.mxu0 0.0
        %510 = vmatpush1.msra.mxu0 0.0
        %511 = vmatprep.subr.mxu0 0.0
        %512 = vmatpush1.msra.mxu0 0.0
        %513 = vmatprep.subr.mxu0 0.0
        %514 = vmatpush1.msra.mxu0 0.0
        %515 = vmatprep.subr.mxu0 0.0
        %516 = vmatpush1.msra.mxu0 0.0
        %517 = vmatprep.subr.mxu0 0.0
        %518 = vmatpush1.msra.mxu0 0.0
        %519 = vmatprep.subr.mxu0 0.0
        %520 = vmatpush1.msra.mxu0 0.0
        %521 = vmatprep.subr.mxu0 0.0
        %522 = vmatpush1.msra.mxu0 0.0
        %523 = vmatprep.subr.mxu0 0.0
        %524 = vmatpush1.msra.mxu0 0.0
        %525 = vmatprep.subr.mxu0 0.0
        %526 = vmatpush1.msra.mxu0 0.0
        %527 = vmatprep.subr.mxu0 0.0
        %528 = vmatpush1.msra.mxu0 0.0
        %529 = vmatprep.subr.mxu0 0.0
        %530 = vmatpush1.msra.mxu0 0.0
        %531 = vmatprep.subr.mxu0 0.0
        %532 = vmatpush1.msra.mxu0 0.0
        %533 = vmatprep.subr.mxu0 0.0
        %534 = vmatpush1.msra.mxu0 0.0
        %535 = vmatprep.subr.mxu0 0.0
        %536 = vmatpush1.msra.mxu0 0.0
        %537 = vmatprep.subr.mxu0 0.0
        %538 = vmatpush1.msra.mxu0 0.0
        %539 = vmatprep.subr.mxu0 0.0
        %540 = vmatpush1.msra.mxu0 0.0
        %541 = vmatprep.subr.mxu0 0.0
        %542 = vmatpush1.msra.mxu0 0.0
        %543 = vmatprep.subr.mxu0 0.0
        %544 = vmatpush1.msra.mxu0 0.0
        %545 = vmatprep.mubr.f32.mxu0 0.0
        %546 = vmatmul.mubr.f32.gmra.mrb[0].mxu0 %v479
        %v547 = vpop.f32.mrb[0].mxu0
        %v548 = vadd.f32 0.0, %v547
        %v549 = vpop.f32.mrb[0].mxu0
        %v550 = vadd.f32 0.0, %v549
        %551 = vdwg.mxu0
        %552 = vmatprep.subr.mxu0 %v464
        %553 = vmatpush1.msra.mxu0 %v463
        %554 = vmatprep.subr.mxu0 %v468
        %555 = vmatpush1.msra.mxu0 %v467
        %556 = vmatprep.subr.mxu0 %v472
        %557 = vmatpush1.msra.mxu0 %v471
        %558 = vmatprep.subr.mxu0 %v476
        %559 = vmatpush1.msra.mxu0 %v475
        %560 = vmatprep.subr.mxu0 0.0
        %561 = vmatpush1.msra.mxu0 0.0
        %562 = vmatprep.subr.mxu0 0.0
        %563 = vmatpush1.msra.mxu0 0.0
        %564 = vmatprep.subr.mxu0 0.0
        %565 = vmatpush1.msra.mxu0 0.0
        %566 = vmatprep.subr.mxu0 0.0
        %567 = vmatpush1.msra.mxu0 0.0
        %568 = vmatprep.subr.mxu0 0.0
        %569 = vmatpush1.msra.mxu0 0.0
        %570 = vmatprep.subr.mxu0 0.0
        %571 = vmatpush1.msra.mxu0 0.0
        %572 = vmatprep.subr.mxu0 0.0
        %573 = vmatpush1.msra.mxu0 0.0
        %574 = vmatprep.subr.mxu0 0.0
        %575 = vmatpush1.msra.mxu0 0.0
        %576 = vmatprep.subr.mxu0 0.0
        %577 = vmatpush1.msra.mxu0 0.0
        %578 = vmatprep.subr.mxu0 0.0
        %579 = vmatpush1.msra.mxu0 0.0
        %580 = vmatprep.subr.mxu0 0.0
        %581 = vmatpush1.msra.mxu0 0.0
        %582 = vmatprep.subr.mxu0 0.0
        %583 = vmatpush1.msra.mxu0 0.0
        %584 = vmatprep.subr.mxu0 0.0
        %585 = vmatpush1.msra.mxu0 0.0
        %586 = vmatprep.subr.mxu0 0.0
        %587 = vmatpush1.msra.mxu0 0.0
        %588 = vmatprep.subr.mxu0 0.0
        %589 = vmatpush1.msra.mxu0 0.0
        %590 = vmatprep.subr.mxu0 0.0
        %591 = vmatpush1.msra.mxu0 0.0
        %592 = vmatprep.subr.mxu0 0.0
        %593 = vmatpush1.msra.mxu0 0.0
        %594 = vmatprep.subr.mxu0 0.0
        %595 = vmatpush1.msra.mxu0 0.0
        %596 = vmatprep.subr.mxu0 0.0
        %597 = vmatpush1.msra.mxu0 0.0
        %598 = vmatprep.subr.mxu0 0.0
        %599 = vmatpush1.msra.mxu0 0.0
        %600 = vmatprep.subr.mxu0 0.0
        %601 = vmatpush1.msra.mxu0 0.0
        %602 = vmatprep.subr.mxu0 0.0
        %603 = vmatpush1.msra.mxu0 0.0
        %604 = vmatprep.subr.mxu0 0.0
        %605 = vmatpush1.msra.mxu0 0.0
        %606 = vmatprep.subr.mxu0 0.0
        %607 = vmatpush1.msra.mxu0 0.0
        %608 = vmatprep.subr.mxu0 0.0
        %609 = vmatpush1.msra.mxu0 0.0
        %610 = vmatprep.subr.mxu0 0.0
        %611 = vmatpush1.msra.mxu0 0.0
        %612 = vmatprep.subr.mxu0 0.0
        %613 = vmatpush1.msra.mxu0 0.0
        %614 = vmatprep.subr.mxu0 0.0
        %615 = vmatpush1.msra.mxu0 0.0
        %616 = vmatprep.mubr.f32.mxu0 0.0
        %617 = vmatmul.mubr.f32.gmra.mrb[0].mxu0 %v479
        %v618 = vpop.f32.mrb[0].mxu0
        %v619 = vadd.f32 0.0, %v618
        %v620 = vpop.f32.mrb[0].mxu0
        %v621 = vadd.f32 0.0, %v620
        %622 = vdwg.mxu0
        %v623 = vadd.f32 %v548, %v550
        %v624 = vadd.f32 %v623, %v619
        %v625 = vadd.f32 %v624, %v621
        %626 = vadd.xlane.f32.xlu0 %v625
        %v627 = vpop.xlane.xlu0 %626
        %v628 = vmul.f32 %v627, 0.0078125
        %v629 = vmul.f32 %v548, %v548
        %v630 = vmul.f32 %v550, %v550
        %v631 = vmul.f32 %v619, %v619
        %v632 = vmul.f32 %v621, %v621
        %v633 = vadd.f32 %v629, %v630
        %v634 = vadd.f32 %v633, %v631
        %v635 = vadd.f32 %v634, %v632
        %636 = vadd.xlane.f32.xlu0 %v635
        %v637 = vpop.xlane.xlu0 %636
        %v638 = vmul.f32 %v637, 0.0078125
        %v639 = vmul.f32 %v628, %v628
        %v640 = vsub.f32 %v638, %v639
        %v641 = vmax.f32 %v640, 0.0
        %v642 = vsub.f32 %v548, %v628
        %v643 = vsub.f32 %v550, %v628
        %v644 = vsub.f32 %v619, %v628
        %v645 = vsub.f32 %v621, %v628
        %v646 = vadd.f32 %v641, 1e-05
        %v647 = vrsqrt.pop %v646
        %v648 = vmul.f32 %v642, %v647
        %v649 = vmul.f32 %v643, %v647
        %v650 = vmul.f32 %v644, %v647
        %v651 = vmul.f32 %v645, %v647
        %v652 = vld [vmem:[#allocation10] sm:$0xff]
        %v653 = vld [vmem:[#allocation10 + $0x8] sm:$0xff]
        %v654 = vld [vmem:[#allocation10 + $0x10] sm:$0xff]
        %v655 = vld [vmem:[#allocation10 + $0x18] sm:$0xff]
        %v656 = vld [vmem:[#allocation10 + $0x20] sm:$0xff]
        %v657 = vld [vmem:[#allocation10 + $0x28] sm:$0xff]
        %v658 = vld [vmem:[#allocation10 + $0x30] sm:$0xff]
        %v659 = vld [vmem:[#allocation10 + $0x38] sm:$0xff]
        %v660 = vld [vmem:[#allocation10 + $0x40] sm:$0xff]
        %v661 = vld [vmem:[#allocation10 + $0x48] sm:$0xff]
        %v662 = vld [vmem:[#allocation10 + $0x50] sm:$0xff]
        %v663 = vld [vmem:[#allocation10 + $0x58] sm:$0xff]
        %v664 = vld [vmem:[#allocation10 + $0x60] sm:$0xff]
        %v665 = vld [vmem:[#allocation10 + $0x68] sm:$0xff]
        %v666 = vld [vmem:[#allocation10 + $0x70] sm:$0xff]
        %v667 = vld [vmem:[#allocation10 + $0x78] sm:$0xff]
        %v668 = vld [vmem:[#allocation10 + $0x80] sm:$0xff]
        %v669 = vld [vmem:[#allocation10 + $0x88] sm:$0xff]
        %v670 = vld [vmem:[#allocation10 + $0x90] sm:$0xff]
        %v671 = vld [vmem:[#allocation10 + $0x98] sm:$0xff]
        %v672 = vld [vmem:[#allocation10 + $0xa0] sm:$0xff]
        %v673 = vld [vmem:[#allocation10 + $0xa8] sm:$0xff]
        %v674 = vld [vmem:[#allocation10 + $0xb0] sm:$0xff]
        %v675 = vld [vmem:[#allocation10 + $0xb8] sm:$0xff]
        %v676 = vld [vmem:[#allocation10 + $0xc0] sm:$0xff]
        %v677 = vld [vmem:[#allocation10 + $0xc8] sm:$0xff]
        %v678 = vld [vmem:[#allocation10 + $0xd0] sm:$0xff]
        %v679 = vld [vmem:[#allocation10 + $0xd8] sm:$0xff]
        %v680 = vld [vmem:[#allocation10 + $0xe0] sm:$0xff]
        %v681 = vld [vmem:[#allocation10 + $0xe8] sm:$0xff]
        %v682 = vld [vmem:[#allocation10 + $0xf0] sm:$0xff]
        %v683 = vld [vmem:[#allocation10 + $0xf8] sm:$0xff]
        %v684 = vld [vmem:[#allocation10 + $0x100] sm:$0xff]
        %v685 = vld [vmem:[#allocation10 + $0x108] sm:$0xff]
        %v686 = vld [vmem:[#allocation10 + $0x110] sm:$0xff]
        %v687 = vld [vmem:[#allocation10 + $0x118] sm:$0xff]
        %v688 = vld [vmem:[#allocation10 + $0x120] sm:$0xff]
        %v689 = vld [vmem:[#allocation10 + $0x128] sm:$0xff]
        %v690 = vld [vmem:[#allocation10 + $0x130] sm:$0xff]
        %v691 = vld [vmem:[#allocation10 + $0x138] sm:$0xff]
        %v692 = vld [vmem:[#allocation10 + $0x140] sm:$0xff]
        %v693 = vld [vmem:[#allocation10 + $0x148] sm:$0xff]
        %v694 = vld [vmem:[#allocation10 + $0x150] sm:$0xff]
        %v695 = vld [vmem:[#allocation10 + $0x158] sm:$0xff]
        %v696 = vld [vmem:[#allocation10 + $0x160] sm:$0xff]
        %v697 = vld [vmem:[#allocation10 + $0x168] sm:$0xff]
        %v698 = vld [vmem:[#allocation10 + $0x170] sm:$0xff]
        %v699 = vld [vmem:[#allocation10 + $0x178] sm:$0xff]
        %v700 = vld [vmem:[#allocation10 + $0x180] sm:$0xff]
        %v701 = vld [vmem:[#allocation10 + $0x188] sm:$0xff]
        %v702 = vld [vmem:[#allocation10 + $0x190] sm:$0xff]
        %v703 = vld [vmem:[#allocation10 + $0x198] sm:$0xff]
        %v704 = vld [vmem:[#allocation10 + $0x1a0] sm:$0xff]
        %v705 = vld [vmem:[#allocation10 + $0x1a8] sm:$0xff]
        %v706 = vld [vmem:[#allocation10 + $0x1b0] sm:$0xff]
        %v707 = vld [vmem:[#allocation10 + $0x1b8] sm:$0xff]
        %v708 = vld [vmem:[#allocation10 + $0x1c0] sm:$0xff]
        %v709 = vld [vmem:[#allocation10 + $0x1c8] sm:$0xff]
        %v710 = vld [vmem:[#allocation10 + $0x1d0] sm:$0xff]
        %v711 = vld [vmem:[#allocation10 + $0x1d8] sm:$0xff]
        %v712 = vld [vmem:[#allocation10 + $0x1e0] sm:$0xff]
        %v713 = vld [vmem:[#allocation10 + $0x1e8] sm:$0xff]
        %v714 = vld [vmem:[#allocation10 + $0x1f0] sm:$0xff]
        %v715 = vld [vmem:[#allocation10 + $0x1f8] sm:$0xff]
        %716 = vmatprep.subr.mxu0 %v653
        %717 = vmatpush1.msra.mxu0 %v652
        %718 = vmatprep.subr.mxu0 %v657
        %719 = vmatpush1.msra.mxu0 %v656
        %720 = vmatprep.subr.mxu0 %v661
        %721 = vmatpush1.msra.mxu0 %v660
        %722 = vmatprep.subr.mxu0 %v665
        %723 = vmatpush1.msra.mxu0 %v664
        %724 = vmatprep.subr.mxu0 %v669
        %725 = vmatpush1.msra.mxu0 %v668
        %726 = vmatprep.subr.mxu0 %v673
        %727 = vmatpush1.msra.mxu0 %v672
        %728 = vmatprep.subr.mxu0 %v677
        %729 = vmatpush1.msra.mxu0 %v676
        %730 = vmatprep.subr.mxu0 %v681
        %731 = vmatpush1.msra.mxu0 %v680
        %732 = vmatprep.subr.mxu0 %v685
        %733 = vmatpush1.msra.mxu0 %v684
        %734 = vmatprep.subr.mxu0 %v689
        %735 = vmatpush1.msra.mxu0 %v688
        %736 = vmatprep.subr.mxu0 %v693
        %737 = vmatpush1.msra.mxu0 %v692
        %738 = vmatprep.subr.mxu0 %v697
        %739 = vmatpush1.msra.mxu0 %v696
        %740 = vmatprep.subr.mxu0 %v701
        %741 = vmatpush1.msra.mxu0 %v700
        %742 = vmatprep.subr.mxu0 %v705
        %743 = vmatpush1.msra.mxu0 %v704
        %744 = vmatprep.subr.mxu0 %v709
        %745 = vmatpush1.msra.mxu0 %v708
        %746 = vmatprep.subr.mxu0 %v713
        %747 = vmatpush1.msra.mxu0 %v712
        %748 = vmatprep.subr.mxu0 0.0
        %749 = vmatpush1.msra.mxu0 0.0
        %750 = vmatprep.subr.mxu0 0.0
        %751 = vmatpush1.msra.mxu0 0.0
        %752 = vmatprep.subr.mxu0 0.0
        %753 = vmatpush1.msra.mxu0 0.0
        %754 = vmatprep.subr.mxu0 0.0
        %755 = vmatpush1.msra.mxu0 0.0
        %756 = vmatprep.subr.mxu0 0.0
        %757 = vmatpush1.msra.mxu0 0.0
        %758 = vmatprep.subr.mxu0 0.0
        %759 = vmatpush1.msra.mxu0 0.0
        %760 = vmatprep.subr.mxu0 0.0
        %761 = vmatpush1.msra.mxu0 0.0
        %762 = vmatprep.subr.mxu0 0.0
        %763 = vmatpush1.msra.mxu0 0.0
        %764 = vmatprep.subr.mxu0 0.0
        %765 = vmatpush1.msra.mxu0 0.0
        %766 = vmatprep.subr.mxu0 0.0
        %767 = vmatpush1.msra.mxu0 0.0
        %768 = vmatprep.subr.mxu0 0.0
        %769 = vmatpush1.msra.mxu0 0.0
        %770 = vmatprep.subr.mxu0 0.0
        %771 = vmatpush1.msra.mxu0 0.0
        %772 = vmatprep.subr.mxu0 0.0
        %773 = vmatpush1.msra.mxu0 0.0
        %774 = vmatprep.subr.mxu0 0.0
        %775 = vmatpush1.msra.mxu0 0.0
        %776 = vmatprep.subr.mxu0 0.0
        %777 = vmatpush1.msra.mxu0 0.0
        %778 = vmatprep.subr.mxu0 0.0
        %779 = vmatpush1.msra.mxu0 0.0
        %780 = vmatprep.mubr.f32.mxu0 0.0
        %781 = vmatmul.mubr.f32.gmra.mrb[0].mxu0 %v460
        %v782 = vpop.f32.mrb[0].mxu0
        %v783 = vadd.f32 0.0, %v782
        %v784 = vpop.f32.mrb[0].mxu0
        %v785 = vadd.f32 0.0, %v784
        %786 = vdwg.mxu0
        %787 = vmatprep.subr.mxu0 %v655
        %788 = vmatpush1.msra.mxu0 %v654
        %789 = vmatprep.subr.mxu0 %v659
        %790 = vmatpush1.msra.mxu0 %v658
        %791 = vmatprep.subr.mxu0 %v663
        %792 = vmatpush1.msra.mxu0 %v662
        %793 = vmatprep.subr.mxu0 %v667
        %794 = vmatpush1.msra.mxu0 %v666
        %795 = vmatprep.subr.mxu0 %v671
        %796 = vmatpush1.msra.mxu0 %v670
        %797 = vmatprep.subr.mxu0 %v675
        %798 = vmatpush1.msra.mxu0 %v674
        %799 = vmatprep.subr.mxu0 %v679
        %800 = vmatpush1.msra.mxu0 %v678
        %801 = vmatprep.subr.mxu0 %v683
        %802 = vmatpush1.msra.mxu0 %v682
        %803 = vmatprep.subr.mxu0 %v687
        %804 = vmatpush1.msra.mxu0 %v686
        %805 = vmatprep.subr.mxu0 %v691
        %806 = vmatpush1.msra.mxu0 %v690
        %807 = vmatprep.subr.mxu0 %v695
        %808 = vmatpush1.msra.mxu0 %v694
        %809 = vmatprep.subr.mxu0 %v699
        %810 = vmatpush1.msra.mxu0 %v698
        %811 = vmatprep.subr.mxu0 %v703
        %812 = vmatpush1.msra.mxu0 %v702
        %813 = vmatprep.subr.mxu0 %v707
        %814 = vmatpush1.msra.mxu0 %v706
        %815 = vmatprep.subr.mxu0 %v711
        %816 = vmatpush1.msra.mxu0 %v710
        %817 = vmatprep.subr.mxu0 %v715
        %818 = vmatpush1.msra.mxu0 %v714
        %819 = vmatprep.subr.mxu0 0.0
        %820 = vmatpush1.msra.mxu0 0.0
        %821 = vmatprep.subr.mxu0 0.0
        %822 = vmatpush1.msra.mxu0 0.0
        %823 = vmatprep.subr.mxu0 0.0
        %824 = vmatpush1.msra.mxu0 0.0
        %825 = vmatprep.subr.mxu0 0.0
        %826 = vmatpush1.msra.mxu0 0.0
        %827 = vmatprep.subr.mxu0 0.0
        %828 = vmatpush1.msra.mxu0 0.0
        %829 = vmatprep.subr.mxu0 0.0
        %830 = vmatpush1.msra.mxu0 0.0
        %831 = vmatprep.subr.mxu0 0.0
        %832 = vmatpush1.msra.mxu0 0.0
        %833 = vmatprep.subr.mxu0 0.0
        %834 = vmatpush1.msra.mxu0 0.0
        %835 = vmatprep.subr.mxu0 0.0
        %836 = vmatpush1.msra.mxu0 0.0
        %837 = vmatprep.subr.mxu0 0.0
        %838 = vmatpush1.msra.mxu0 0.0
        %839 = vmatprep.subr.mxu0 0.0
        %840 = vmatpush1.msra.mxu0 0.0
        %841 = vmatprep.subr.mxu0 0.0
        %842 = vmatpush1.msra.mxu0 0.0
        %843 = vmatprep.subr.mxu0 0.0
        %844 = vmatpush1.msra.mxu0 0.0
        %845 = vmatprep.subr.mxu0 0.0
        %846 = vmatpush1.msra.mxu0 0.0
        %847 = vmatprep.subr.mxu0 0.0
        %848 = vmatpush1.msra.mxu0 0.0
        %849 = vmatprep.subr.mxu0 0.0
        %850 = vmatpush1.msra.mxu0 0.0
        %851 = vmatprep.mubr.f32.mxu0 0.0
        %852 = vmatmul.mubr.f32.gmra.mrb[0].mxu0 %v460
        %v853 = vpop.f32.mrb[0].mxu0
        %v854 = vadd.f32 0.0, %v853
        %v855 = vpop.f32.mrb[0].mxu0
        %v856 = vadd.f32 0.0, %v855
        %857 = vdwg.mxu0
        %v858 = vld [vmem:[%s401] sm:$0xff]
        %v859 = vld [vmem:[%s5] sm:$0xff]
        %v860 = vadd.f32 %v783, %v785
        %v861 = vadd.f32 %v860, %v854
        %v862 = vadd.f32 %v861, %v856
        %863 = vadd.xlane.f32.xlu0 %v862
        %v864 = vpop.xlane.xlu0 %863
        %v865 = vmul.f32 %v864, 0.0078125
        %v866 = vmul.f32 %v783, %v783
        %v867 = vmul.f32 %v785, %v785
        %v868 = vmul.f32 %v854, %v854
        %v869 = vmul.f32 %v856, %v856
        %v870 = vadd.f32 %v866, %v867
        %v871 = vadd.f32 %v870, %v868
        %v872 = vadd.f32 %v871, %v869
        %873 = vadd.xlane.f32.xlu0 %v872
        %v874 = vpop.xlane.xlu0 %873
        %v875 = vmul.f32 %v874, 0.0078125
        %v876 = vmul.f32 %v865, %v865
        %v877 = vsub.f32 %v875, %v876
        %v878 = vmax.f32 %v877, 0.0
        %v879 = vsub.f32 %v783, %v865
        %v880 = vsub.f32 %v785, %v865
        %v881 = vsub.f32 %v854, %v865
        %v882 = vsub.f32 %v856, %v865
        %v883 = vadd.f32 %v878, 1e-05
        %v884 = vrsqrt.pop %v883
        %v885 = vmul.f32 %v879, %v884
        %v886 = vmul.f32 %v880, %v884
        %v887 = vmul.f32 %v881, %v884
        %v888 = vmul.f32 %v882, %v884
        %v890 = vlaneseq
        %v891 = vshrl.u32 %v890, 7
        %v892 = vsub.s32 0, %v891
        %v893 = vrot.slane %v859, %v892
        %v894 = vlaneseq
        %v895 = vshrl.u32 %v894, 7
        %v896 = vsub.s32 2, %v895
        %v897 = vrot.slane %v859, %v896
        %v898 = vlaneseq
        %v899 = vshrl.u32 %v898, 7
        %v900 = vsub.s32 4, %v899
        %v901 = vrot.slane %v859, %v900
        %v902 = vlaneseq
        %v903 = vshrl.u32 %v902, 7
        %v904 = vsub.s32 6, %v903
        %v905 = vrot.slane %v859, %v904
        %v910 = vlaneseq
        %v911 = vshrl.u32 %v910, 7
        %v912 = vsub.s32 0, %v911
        %v913 = vrot.slane %v893, %v912
        %v914 = vlaneseq
        %v915 = vshrl.u32 %v914, 7
        %v916 = vsub.s32 0, %v915
        %v917 = vrot.slane %v897, %v916
        %v918 = vlaneseq
        %v919 = vshrl.u32 %v918, 7
        %v920 = vsub.s32 0, %v919
        %v921 = vrot.slane %v901, %v920
        %v922 = vlaneseq
        %v923 = vshrl.u32 %v922, 7
        %v924 = vsub.s32 0, %v923
        %v925 = vrot.slane %v905, %v924
        %v926 = vmul.f32 %v648, %v913
        %v927 = vmul.f32 %v649, %v917
        %v928 = vmul.f32 %v650, %v921
        %v929 = vmul.f32 %v651, %v925
        %v930 = vlaneseq
        %v931 = vshrl.u32 %v930, 7
        %v932 = vsub.s32 1, %v931
        %v933 = vrot.slane %v859, %v932
        %v934 = vlaneseq
        %v935 = vshrl.u32 %v934, 7
        %v936 = vsub.s32 3, %v935
        %v937 = vrot.slane %v859, %v936
        %v938 = vlaneseq
        %v939 = vshrl.u32 %v938, 7
        %v940 = vsub.s32 5, %v939
        %v941 = vrot.slane %v859, %v940
        %v942 = vlaneseq
        %v943 = vshrl.u32 %v942, 7
        %v944 = vsub.s32 7, %v943
        %v945 = vrot.slane %v859, %v944
        %v950 = vlaneseq
        %v951 = vshrl.u32 %v950, 7
        %v952 = vsub.s32 1, %v951
        %v953 = vrot.slane %v933, %v952
        %v954 = vlaneseq
        %v955 = vshrl.u32 %v954, 7
        %v956 = vsub.s32 1, %v955
        %v957 = vrot.slane %v937, %v956
        %v958 = vlaneseq
        %v959 = vshrl.u32 %v958, 7
        %v960 = vsub.s32 1, %v959
        %v961 = vrot.slane %v941, %v960
        %v962 = vlaneseq
        %v963 = vshrl.u32 %v962, 7
        %v964 = vsub.s32 1, %v963
        %v965 = vrot.slane %v945, %v964
        %v966 = vmul.f32 %v885, %v953
        %v967 = vmul.f32 %v886, %v957
        %v968 = vmul.f32 %v887, %v961
        %v969 = vmul.f32 %v888, %v965
        %v970 = vadd.f32 %v926, %v966
        %v971 = vadd.f32 %v927, %v967
        %v972 = vadd.f32 %v928, %v968
        %v973 = vadd.f32 %v929, %v969
        %v974 = vld [vmem:[%s6] sm:$0xf]
        %v976 = vlaneseq
        %v977 = vshrl.u32 %v976, 7
        %v978 = vsub.s32 0, %v977
        %v979 = vrot.slane %v974, %v978
        %v980 = vlaneseq
        %v981 = vshrl.u32 %v980, 7
        %v982 = vsub.s32 1, %v981
        %v983 = vrot.slane %v974, %v982
        %v984 = vlaneseq
        %v985 = vshrl.u32 %v984, 7
        %v986 = vsub.s32 2, %v985
        %v987 = vrot.slane %v974, %v986
        %v988 = vlaneseq
        %v989 = vshrl.u32 %v988, 7
        %v990 = vsub.s32 3, %v989
        %v991 = vrot.slane %v974, %v990
        %v996 = vadd.f32 %v970, %v979
        %v997 = vadd.f32 %v971, %v983
        %v998 = vadd.f32 %v972, %v987
        %v999 = vadd.f32 %v973, %v991
        %v1000 = vmul.f32 %v996, 0.5
        %v1001 = vmul.f32 %v997, 0.5
        %v1002 = vmul.f32 %v998, 0.5
        %v1003 = vmul.f32 %v999, 0.5
        %v1004 = vtanh.pop %v1000
        %v1005 = vtanh.pop %v1001
        %v1006 = vtanh.pop %v1002
        %v1007 = vtanh.pop %v1003
        %v1008 = vmul.f32 %v1004, 0.5
        %v1009 = vmul.f32 %v1005, 0.5
        %v1010 = vmul.f32 %v1006, 0.5
        %v1011 = vmul.f32 %v1007, 0.5
        %v1012 = vadd.f32 %v1008, 0.5
        %v1013 = vadd.f32 %v1009, 0.5
        %v1014 = vadd.f32 %v1010, 0.5
        %v1015 = vadd.f32 %v1011, 0.5
        %v1016 = vmul.f32 %v1013, %v858
        %v1017 = vsub.f32 %v1014, %v1012
        %v1018 = vadd.f32 %v1016, %v1017
        %v1019 = vld [vmem:[%s7] sm:$0x3]
        %1020 = vadd.xlane.f32.xlu0 %v1018
        %v1021 = vpop.xlane.xlu0 %1020
        %v1022 = vmul.f32 %v1021, 0.03125
        %v1023 = vmul.f32 %v1018, %v1018
        %1024 = vadd.xlane.f32.xlu0 %v1023
        %v1025 = vpop.xlane.xlu0 %1024
        %v1026 = vmul.f32 %v1025, 0.03125
        %v1027 = vmul.f32 %v1022, %v1022
        %v1028 = vsub.f32 %v1026, %v1027
        %v1029 = vmax.f32 %v1028, 0.0
        %v1030 = vsub.f32 %v1018, %v1022
        %v1031 = vadd.f32 %v1029, 1e-05
        %v1032 = vrsqrt.pop %v1031
        %v1033 = vmul.f32 %v1030, %v1032
        %v1034 = vlaneseq
        %v1035 = vshrl.u32 %v1034, 7
        %v1036 = vsub.s32 0, %v1035
        %v1037 = vrot.slane %v1019, %v1036
        %v1038 = vmul.f32 %v1033, %v1037
        %v1039 = vlaneseq
        %v1040 = vshrl.u32 %v1039, 7
        %v1041 = vsub.s32 1, %v1040
        %v1042 = vrot.slane %v1019, %v1041
        %v1043 = vadd.f32 %v1038, %v1042
        %v1044 = vtanh.pop %v1043
        %v1045 = vsub.f32 %v1044, %v1015
        %1046 = vst [vmem:[%s451] sm:$0xff] %v1045
        %1047 = vst [vmem:[%s458] sm:$0xff] %v1043
        %s1048 = sand.u32 %s225, 1
        %s1049 = scalar_lea.sflag [#allocation4], %s1048
        %s1050 = sand.u32 %s225, 1
        %s1051 = smul.addr %s1050, 8
        %s1052 = scalar_lea.vmem [#allocation11], %s1051
        %s1053 = sand.u32 %s251, 1
        %s1054 = scalar_lea.sflag [#allocation13], %s1053
        %s1055 = sand.u32 %s251, 1
        %s1056 = smul.addr %s1055, 8
        %s1057 = scalar_lea.vmem [#allocation12], %s1056
        // Predicated region
        $region73: #{tpu_custom_call.1} parent=51 // pred_check
          %p1058 = pneg %p235
        $region74: #{tpu_custom_call.1} parent=51 // pred_check_branch
          %1060 = sbr.rel (%p1058) target = $region76
        $region75: #{tpu_custom_call.1} parent=51 // pred_region
          %s1062 = ssub.s32 128, 128
          %1063 = vsyncadd %s1049, %s1062
          %s1064 = smul.addr %s34, 128
          %s1065 = scalar_lea.hbm %s8, %s1064
          %s1067 = sshll.u32 %s1052, 4
          %s1068 = int_to_ptr.vmem [resolvable:$true] %s1067
          %1070 = dma.vmem_to_hbm [thread:$0]  %s1068, 128, %s1065, %s1049
        $region76: #{tpu_custom_call.1} parent=51 // pred_fallthru
          _
        // Predicated region
        $region77: #{tpu_custom_call.1} parent=51 // pred_check
          %p1071 = pneg %p261
        $region78: #{tpu_custom_call.1} parent=51 // pred_check_branch
          %1073 = sbr.rel (%p1071) target = $region80
        $region79: #{tpu_custom_call.1} parent=51 // pred_region
          %s1075 = ssub.s32 128, 128
          %1076 = vsyncadd %s1054, %s1075
          %s1077 = smul.addr %s34, 128
          %s1078 = scalar_lea.hbm %s9, %s1077
          %s1080 = sshll.u32 %s1057, 4
          %s1081 = int_to_ptr.vmem [resolvable:$true] %s1080
          %1083 = dma.vmem_to_hbm [thread:$0]  %s1081, 128, %s1078, %s1054
        $region80: #{tpu_custom_call.1} parent=51 // pred_fallthru
          _
      $region52: #{tpu_custom_call.1} parent=5 // pred_fallthru
        _
      %p1084 = scmp.le.s32.totalorder 2, %s29
      // Predicated region
      $region81: #{tpu_custom_call.1} parent=5 // pred_check
        %p1085 = pneg %p1084
      $region82: #{tpu_custom_call.1} parent=5 // pred_check_branch
        %1087 = sbr.rel (%p1085) target = $region84
      $region83: #{tpu_custom_call.1} parent=5 // pred_region
        %s1088 = ssub.s32 %s29, 2
        // Predicated region
        $region85: #{tpu_custom_call.1} parent=83 // pred_check
          %p1089 = pneg %p241
        $region86: #{tpu_custom_call.1} parent=83 // pred_check_branch
          %1091 = sbr.rel (%p1089) target = $region88
        $region87: #{tpu_custom_call.1} parent=83 // pred_region
          %s1092 = sand.u32 %s226, 1
          %s1093 = scalar_lea.sflag [#allocation4], %s1092
          %s1094 = sand.u32 %s226, 1
          %s1095 = smul.addr %s1094, 8
          %s1096 = scalar_lea.vmem [#allocation11], %s1095
          %1097 = dma.done %s1093, 128
        $region88: #{tpu_custom_call.1} parent=83 // pred_fallthru
          _
        // Predicated region
        $region89: #{tpu_custom_call.1} parent=83 // pred_check
          %p1098 = pneg %p267
        $region90: #{tpu_custom_call.1} parent=83 // pred_check_branch
          %1100 = sbr.rel (%p1098) target = $region92
        $region91: #{tpu_custom_call.1} parent=83 // pred_region
          %s1101 = sand.u32 %s252, 1
          %s1102 = scalar_lea.sflag [#allocation13], %s1101
          %s1103 = sand.u32 %s252, 1
          %s1104 = smul.addr %s1103, 8
          %s1105 = scalar_lea.vmem [#allocation12], %s1104
          %1106 = dma.done %s1102, 128
        $region92: #{tpu_custom_call.1} parent=83 // pred_fallthru
          _
      $region84: #{tpu_custom_call.1} parent=5 // pred_fallthru
        _
    $region6: #{tpu_custom_call.1} parent=1 // loop_footer
      %s33 = sadd.s32 1, %s29
    $region7: #{tpu_custom_call.1} parent=1 // loop_footer_branch
      %28 = sbr.rel target = $region3
    $region8: #{tpu_custom_call.1} parent=1 // loop_exit
      _
    %1107 = vsyncpa [#allocation3], 1
    %s1108 = scalar_lea.sflag [#allocation3], 1
    %1109 = vsyncpa %s1108, 1
    %1110 = vsyncpa [#allocation6], 1
    %s1111 = scalar_lea.sflag [#allocation6], 1
    %1112 = vsyncpa %s1111, 1
    %1113 = vsyncpa [#allocation9], 1
    %1114 = vsyncpa [#allocation4], 1
    %s1115 = scalar_lea.sflag [#allocation4], 1
    %1116 = vsyncpa %s1115, 1
    %1117 = vsyncpa [#allocation13], 1
    %s1118 = scalar_lea.sflag [#allocation13], 1
    %1119 = vsyncpa %s1118, 1

</llo_original>
